<compile_context>
chip_gen: v6e
topology: v6e:2x2x1
jax: 0.10.0
libtpu: 0.0.40
codegen_flags: <defaults>
</compile_context>

<pallas_src>
import numpy as np
import jax
import jax.numpy as jnp
from jax.experimental import pallas as pl
from jax.experimental.pallas import tpu as pltpu

# ---------------- module architecture (mirrors the PyTorch __init__) --------
NUMBERS_IN_LAYERS = [10, 10, 9, 9, 8, 8, 7, 7, 6, 6]
ENC_PAIRS = list(zip(NUMBERS_IN_LAYERS, NUMBERS_IN_LAYERS[1:]))
REV = list(reversed(NUMBERS_IN_LAYERS))
DEC_PAIRS = list(zip(REV, REV[1:]))
ALL_PAIRS = ENC_PAIRS + DEC_PAIRS            # 18 Linear layers total
NUM_LAYERS = len(ALL_PAIRS)

F_IN = NUMBERS_IN_LAYERS[0]    # 10 input features
F_OUT = REV[-1]                # 10 output features
K0 = 16                        # lane-padded input width for layer 0 (bf16 sublane pack)
N_PAD = 128                    # lane-dense width of all weights / hidden activations
B_TILE_MAX = 512               # batch rows per grid step


# ---------------- Pallas kernel ---------------------------------------------
def autoencoder_kernel(x_ref, w_ref, b_ref, o_ref):
    """x_ref: (Bt, 16)  f32   input tile (lanes >= 10 are zero)
       w_ref: (18, 128, 128) bf16  packed W.T stacks (zero rows >= fan_in,
                                   zero cols >= fan_out) -- resident in VMEM
       b_ref: (18, 128) f32        biases (zero lanes >= fan_out)
       o_ref: (Bt, 10)  f32        output tile."""
    # Layer 0: aligned K=16 contraction against the first 16 weight rows.
    zb = x_ref[...].astype(jnp.bfloat16)                       # (Bt, 16)
    w0 = w_ref[0]                                              # (128, 128) bf16
    z = jnp.dot(zb, w0[:K0, :], preferred_element_type=jnp.float32)
    z = jnp.maximum(z + b_ref[0], 0.0)                         # (Bt, 128) f32

    # Layers 1..17: activation stays lane-dense at 128 lanes (no per-layer
    # lane-slice relayout); bf16 dot inputs, f32 accumulate + bias + ReLU.
    for i in range(1, NUM_LAYERS):                             # static unroll
        acc = jnp.dot(z.astype(jnp.bfloat16), w_ref[i],
                      preferred_element_type=jnp.float32)
        z = jnp.maximum(acc + b_ref[i], 0.0)

    o_ref[...] = z[:, :F_OUT].astype(o_ref.dtype)


def _batch_tile(batch):
    if batch <= B_TILE_MAX:
        return max(8, ((batch + 7) // 8) * 8)   # one grid step, sublane-aligned
    return B_TILE_MAX


@jax.jit
def autoencoder_forward(x, w_stack, b_stack):
    """x: (B, 10) float32. Returns (B, 10) float32."""
    B = x.shape[0]
    bt = _batch_tile(B)
    b_pad = ((B + bt - 1) // bt) * bt
    # Tiny fused XLA pad: batch -> tile multiple (so no partial tail tile),
    # lanes 10 -> 16 (zeros; exact since padded weight rows are zero).
    x_p = jnp.pad(x, ((0, b_pad - B), (0, K0 - F_IN)))

    out = pl.pallas_call(
        autoencoder_kernel,
        out_shape=jax.ShapeDtypeStruct((b_pad, F_OUT), jnp.float32),
        grid_spec=pltpu.PrefetchScalarGridSpec(
            num_scalar_prefetch=0,
            grid=(b_pad // bt,),
            in_specs=[
                pl.BlockSpec((bt, K0), lambda b: (b, 0)),
                # weights / biases pinned resident: constant block index => no
                # re-DMA across grid steps.
                pl.BlockSpec((NUM_LAYERS, N_PAD, N_PAD), lambda b: (0, 0, 0)),
                pl.BlockSpec((NUM_LAYERS, N_PAD), lambda b: (0, 0)),
            ],
            out_specs=pl.BlockSpec((bt, F_OUT), lambda b: (b, 0)),
        ),
        compiler_params=pltpu.CompilerParams(
            dimension_semantics=("parallel",)),
    )(x_p, w_stack, b_stack)

    return out[:B] if b_pad != B else out


# ---------------- deterministic parameter construction ----------------------
def make_params(seed=15000):
    """Kaiming-uniform weights (fan_in, gain=sqrt(2)), zero biases —
    matching initialize_weights() semantics, deterministic via JAX PRNG.
    Weights are stored transposed (in, out), zero-padded into (18, 128, 128)
    and cast to bf16 (MXU input dtype); biases stay f32."""
    key = jax.random.PRNGKey(seed)
    w_stack = np.zeros((NUM_LAYERS, N_PAD, N_PAD), np.float32)
    b_stack = np.zeros((NUM_LAYERS, N_PAD), np.float32)
    for i, (fan_in, fan_out) in enumerate(ALL_PAIRS):
        key, sub = jax.random.split(key)
        bound = np.sqrt(2.0) * np.sqrt(3.0 / fan_in)   # kaiming_uniform_, a=0
        # PyTorch Linear weight is (out, in); y = x @ W.T, so store W.T = (in, out)
        w = jax.random.uniform(sub, (fan_in, fan_out),
                               minval=-bound, maxval=bound, dtype=jnp.float32)
        w_stack[i, :fan_in, :fan_out] = np.asarray(w)
        # bias stays 0 (nn.init.constant_(n.bias, 0))
    return jnp.asarray(w_stack, dtype=jnp.bfloat16), jnp.asarray(b_stack)


# ---------------- reference (plain JAX, kernel-matched numerics) ------------
def reference_forward(x, w_stack, b_stack):
    """Same math as the kernel: bf16 dot inputs, f32 accumulate/bias/ReLU."""
    z = x
    for i, (fan_in, fan_out) in enumerate(ALL_PAIRS):
        w = w_stack[i, :fan_in, :fan_out]              # bf16
        b = b_stack[i, :fan_out]                       # f32
        acc = jnp.dot(z[:, :fan_in].astype(jnp.bfloat16), w,
                      preferred_element_type=jnp.float32)
        z = jnp.maximum(acc + b, 0.0)
    return z


if __name__ == "__main__":
    batch = 2
    features = NUMBERS_IN_LAYERS[0]   # 10 input features per forward()

    key = jax.random.PRNGKey(0)
    x = jax.random.normal(key, (batch, features), dtype=jnp.float32)

    w_stack, b_stack = make_params(seed=15000)

    out = autoencoder_forward(x, w_stack, b_stack)
    out = jax.block_until_ready(out)

    ref = reference_forward(x, w_stack, b_stack)
    np.testing.assert_allclose(np.asarray(out), np.asarray(ref),
                               rtol=1e-3, atol=1e-3)
    assert out.shape == (batch, features)

    print("KERNEL_OK")
</pallas_src>

<mosaic_0001>
module attributes {stable_mosaic.version = 11 : i64} {
  func.func @autoencoder_kernel(%arg0: i32, %arg1: memref<8x16xf32, #tpu.memory_space<vmem>>, %arg2: memref<18x128x128xbf16, #tpu.memory_space<vmem>>, %arg3: memref<18x128xf32, #tpu.memory_space<vmem>>, %arg4: memref<8x10xf32, #tpu.memory_space<vmem>>) attributes {dimension_semantics = [#tpu.dimension_semantics<parallel>], iteration_bounds = array<i64: 1>, scalar_prefetch = 0 : i64, scratch_operands = 0 : i64, tpu.core_type = #tpu.core_type<tc>, window_params = [{transform_indices = @transform_0, window_bounds = array<i64: 8, 16>}, {pipeline_mode = #tpu.pipeline_mode<synchronous>, transform_indices = @transform_1, window_bounds = array<i64: 18, 128, 128>}, {pipeline_mode = #tpu.pipeline_mode<synchronous>, transform_indices = @transform_2, window_bounds = array<i64: 18, 128>}, {transform_indices = @transform_3, window_bounds = array<i64: 8, 10>}]} {
    %c0 = arith.constant 0 : index
    %c0_0 = arith.constant 0 : index
    %0 = vector.load %arg1[%c0, %c0_0] : memref<8x16xf32, #tpu.memory_space<vmem>>, vector<8x16xf32>
    %1 = arith.truncf %0 : vector<8x16xf32> to vector<8x16xbf16>
    %c0_1 = arith.constant 0 : index
    %c0_2 = arith.constant 0 : index
    %c0_3 = arith.constant 0 : index
    %2 = vector.load %arg2[%c0_1, %c0_2, %c0_3] : memref<18x128x128xbf16, #tpu.memory_space<vmem>>, vector<1x128x128xbf16>
    %3 = vector.shape_cast %2 : vector<1x128x128xbf16> to vector<128x128xbf16>
    %4 = vector.extract_strided_slice %3 {offsets = [0, 0], sizes = [16, 128], strides = [1, 1]} : vector<128x128xbf16> to vector<16x128xbf16>
    %cst = arith.constant dense<0.000000e+00> : vector<8x128xf32>
    %5 = tpu.matmul %1, %4, %cst {dimension_numbers = #tpu.dot_dimension_numbers<[1], [0], [0], [1], [0, 0, 1, 1], [], []>} : vector<8x16xbf16>, vector<16x128xbf16>, vector<8x128xf32> -> vector<8x128xf32>
    %c0_4 = arith.constant 0 : index
    %c0_5 = arith.constant 0 : index
    %6 = vector.load %arg3[%c0_4, %c0_5] : memref<18x128xf32, #tpu.memory_space<vmem>>, vector<1x128xf32>
    %7 = vector.shape_cast %6 : vector<1x128xf32> to vector<128xf32>
    %8 = vector.shape_cast %7 : vector<128xf32> to vector<1x128xf32>
    %9 = vector.broadcast %8 : vector<1x128xf32> to vector<8x128xf32>
    %10 = arith.addf %5, %9 : vector<8x128xf32>
    %cst_6 = arith.constant 0.000000e+00 : f32
    %11 = vector.broadcast %cst_6 : f32 to vector<8x128xf32>
    %12 = arith.maximumf %10, %11 : vector<8x128xf32>
    %13 = arith.truncf %12 : vector<8x128xf32> to vector<8x128xbf16>
    %c1 = arith.constant 1 : index
    %c0_7 = arith.constant 0 : index
    %c0_8 = arith.constant 0 : index
    %14 = vector.load %arg2[%c1, %c0_7, %c0_8] : memref<18x128x128xbf16, #tpu.memory_space<vmem>>, vector<1x128x128xbf16>
    %15 = vector.shape_cast %14 : vector<1x128x128xbf16> to vector<128x128xbf16>
    %cst_9 = arith.constant dense<0.000000e+00> : vector<8x128xf32>
    %16 = tpu.matmul %13, %15, %cst_9 {dimension_numbers = #tpu.dot_dimension_numbers<[1], [0], [0], [1], [0, 0, 1, 1], [], []>} : vector<8x128xbf16>, vector<128x128xbf16>, vector<8x128xf32> -> vector<8x128xf32>
    %c1_10 = arith.constant 1 : index
    %c0_11 = arith.constant 0 : index
    %17 = vector.load %arg3[%c1_10, %c0_11] : memref<18x128xf32, #tpu.memory_space<vmem>>, vector<1x128xf32>
    %18 = vector.shape_cast %17 : vector<1x128xf32> to vector<128xf32>
    %19 = vector.shape_cast %18 : vector<128xf32> to vector<1x128xf32>
    %20 = vector.broadcast %19 : vector<1x128xf32> to vector<8x128xf32>
    %21 = arith.addf %16, %20 : vector<8x128xf32>
    %cst_12 = arith.constant 0.000000e+00 : f32
    %22 = vector.broadcast %cst_12 : f32 to vector<8x128xf32>
    %23 = arith.maximumf %21, %22 : vector<8x128xf32>
    %24 = arith.truncf %23 : vector<8x128xf32> to vector<8x128xbf16>
    %c2 = arith.constant 2 : index
    %c0_13 = arith.constant 0 : index
    %c0_14 = arith.constant 0 : index
    %25 = vector.load %arg2[%c2, %c0_13, %c0_14] : memref<18x128x128xbf16, #tpu.memory_space<vmem>>, vector<1x128x128xbf16>
    %26 = vector.shape_cast %25 : vector<1x128x128xbf16> to vector<128x128xbf16>
    %cst_15 = arith.constant dense<0.000000e+00> : vector<8x128xf32>
    %27 = tpu.matmul %24, %26, %cst_15 {dimension_numbers = #tpu.dot_dimension_numbers<[1], [0], [0], [1], [0, 0, 1, 1], [], []>} : vector<8x128xbf16>, vector<128x128xbf16>, vector<8x128xf32> -> vector<8x128xf32>
    %c2_16 = arith.constant 2 : index
    %c0_17 = arith.constant 0 : index
    %28 = vector.load %arg3[%c2_16, %c0_17] : memref<18x128xf32, #tpu.memory_space<vmem>>, vector<1x128xf32>
    %29 = vector.shape_cast %28 : vector<1x128xf32> to vector<128xf32>
    %30 = vector.shape_cast %29 : vector<128xf32> to vector<1x128xf32>
    %31 = vector.broadcast %30 : vector<1x128xf32> to vector<8x128xf32>
    %32 = arith.addf %27, %31 : vector<8x128xf32>
    %cst_18 = arith.constant 0.000000e+00 : f32
    %33 = vector.broadcast %cst_18 : f32 to vector<8x128xf32>
    %34 = arith.maximumf %32, %33 : vector<8x128xf32>
    %35 = arith.truncf %34 : vector<8x128xf32> to vector<8x128xbf16>
    %c3 = arith.constant 3 : index
    %c0_19 = arith.constant 0 : index
    %c0_20 = arith.constant 0 : index
    %36 = vector.load %arg2[%c3, %c0_19, %c0_20] : memref<18x128x128xbf16, #tpu.memory_space<vmem>>, vector<1x128x128xbf16>
    %37 = vector.shape_cast %36 : vector<1x128x128xbf16> to vector<128x128xbf16>
    %cst_21 = arith.constant dense<0.000000e+00> : vector<8x128xf32>
    %38 = tpu.matmul %35, %37, %cst_21 {dimension_numbers = #tpu.dot_dimension_numbers<[1], [0], [0], [1], [0, 0, 1, 1], [], []>} : vector<8x128xbf16>, vector<128x128xbf16>, vector<8x128xf32> -> vector<8x128xf32>
    %c3_22 = arith.constant 3 : index
    %c0_23 = arith.constant 0 : index
    %39 = vector.load %arg3[%c3_22, %c0_23] : memref<18x128xf32, #tpu.memory_space<vmem>>, vector<1x128xf32>
    %40 = vector.shape_cast %39 : vector<1x128xf32> to vector<128xf32>
    %41 = vector.shape_cast %40 : vector<128xf32> to vector<1x128xf32>
    %42 = vector.broadcast %41 : vector<1x128xf32> to vector<8x128xf32>
    %43 = arith.addf %38, %42 : vector<8x128xf32>
    %cst_24 = arith.constant 0.000000e+00 : f32
    %44 = vector.broadcast %cst_24 : f32 to vector<8x128xf32>
    %45 = arith.maximumf %43, %44 : vector<8x128xf32>
    %46 = arith.truncf %45 : vector<8x128xf32> to vector<8x128xbf16>
    %c4 = arith.constant 4 : index
    %c0_25 = arith.constant 0 : index
    %c0_26 = arith.constant 0 : index
    %47 = vector.load %arg2[%c4, %c0_25, %c0_26] : memref<18x128x128xbf16, #tpu.memory_space<vmem>>, vector<1x128x128xbf16>
    %48 = vector.shape_cast %47 : vector<1x128x128xbf16> to vector<128x128xbf16>
    %cst_27 = arith.constant dense<0.000000e+00> : vector<8x128xf32>
    %49 = tpu.matmul %46, %48, %cst_27 {dimension_numbers = #tpu.dot_dimension_numbers<[1], [0], [0], [1], [0, 0, 1, 1], [], []>} : vector<8x128xbf16>, vector<128x128xbf16>, vector<8x128xf32> -> vector<8x128xf32>
    %c4_28 = arith.constant 4 : index
    %c0_29 = arith.constant 0 : index
    %50 = vector.load %arg3[%c4_28, %c0_29] : memref<18x128xf32, #tpu.memory_space<vmem>>, vector<1x128xf32>
    %51 = vector.shape_cast %50 : vector<1x128xf32> to vector<128xf32>
    %52 = vector.shape_cast %51 : vector<128xf32> to vector<1x128xf32>
    %53 = vector.broadcast %52 : vector<1x128xf32> to vector<8x128xf32>
    %54 = arith.addf %49, %53 : vector<8x128xf32>
    %cst_30 = arith.constant 0.000000e+00 : f32
    %55 = vector.broadcast %cst_30 : f32 to vector<8x128xf32>
    %56 = arith.maximumf %54, %55 : vector<8x128xf32>
    %57 = arith.truncf %56 : vector<8x128xf32> to vector<8x128xbf16>
    %c5 = arith.constant 5 : index
    %c0_31 = arith.constant 0 : index
    %c0_32 = arith.constant 0 : index
    %58 = vector.load %arg2[%c5, %c0_31, %c0_32] : memref<18x128x128xbf16, #tpu.memory_space<vmem>>, vector<1x128x128xbf16>
    %59 = vector.shape_cast %58 : vector<1x128x128xbf16> to vector<128x128xbf16>
    %cst_33 = arith.constant dense<0.000000e+00> : vector<8x128xf32>
    %60 = tpu.matmul %57, %59, %cst_33 {dimension_numbers = #tpu.dot_dimension_numbers<[1], [0], [0], [1], [0, 0, 1, 1], [], []>} : vector<8x128xbf16>, vector<128x128xbf16>, vector<8x128xf32> -> vector<8x128xf32>
    %c5_34 = arith.constant 5 : index
    %c0_35 = arith.constant 0 : index
    %61 = vector.load %arg3[%c5_34, %c0_35] : memref<18x128xf32, #tpu.memory_space<vmem>>, vector<1x128xf32>
    %62 = vector.shape_cast %61 : vector<1x128xf32> to vector<128xf32>
    %63 = vector.shape_cast %62 : vector<128xf32> to vector<1x128xf32>
    %64 = vector.broadcast %63 : vector<1x128xf32> to vector<8x128xf32>
    %65 = arith.addf %60, %64 : vector<8x128xf32>
    %cst_36 = arith.constant 0.000000e+00 : f32
    %66 = vector.broadcast %cst_36 : f32 to vector<8x128xf32>
    %67 = arith.maximumf %65, %66 : vector<8x128xf32>
    %68 = arith.truncf %67 : vector<8x128xf32> to vector<8x128xbf16>
    %c6 = arith.constant 6 : index
    %c0_37 = arith.constant 0 : index
    %c0_38 = arith.constant 0 : index
    %69 = vector.load %arg2[%c6, %c0_37, %c0_38] : memref<18x128x128xbf16, #tpu.memory_space<vmem>>, vector<1x128x128xbf16>
    %70 = vector.shape_cast %69 : vector<1x128x128xbf16> to vector<128x128xbf16>
    %cst_39 = arith.constant dense<0.000000e+00> : vector<8x128xf32>
    %71 = tpu.matmul %68, %70, %cst_39 {dimension_numbers = #tpu.dot_dimension_numbers<[1], [0], [0], [1], [0, 0, 1, 1], [], []>} : vector<8x128xbf16>, vector<128x128xbf16>, vector<8x128xf32> -> vector<8x128xf32>
    %c6_40 = arith.constant 6 : index
    %c0_41 = arith.constant 0 : index
    %72 = vector.load %arg3[%c6_40, %c0_41] : memref<18x128xf32, #tpu.memory_space<vmem>>, vector<1x128xf32>
    %73 = vector.shape_cast %72 : vector<1x128xf32> to vector<128xf32>
    %74 = vector.shape_cast %73 : vector<128xf32> to vector<1x128xf32>
    %75 = vector.broadcast %74 : vector<1x128xf32> to vector<8x128xf32>
    %76 = arith.addf %71, %75 : vector<8x128xf32>
    %cst_42 = arith.constant 0.000000e+00 : f32
    %77 = vector.broadcast %cst_42 : f32 to vector<8x128xf32>
    %78 = arith.maximumf %76, %77 : vector<8x128xf32>
    %79 = arith.truncf %78 : vector<8x128xf32> to vector<8x128xbf16>
    %c7 = arith.constant 7 : index
    %c0_43 = arith.constant 0 : index
    %c0_44 = arith.constant 0 : index
    %80 = vector.load %arg2[%c7, %c0_43, %c0_44] : memref<18x128x128xbf16, #tpu.memory_space<vmem>>, vector<1x128x128xbf16>
    %81 = vector.shape_cast %80 : vector<1x128x128xbf16> to vector<128x128xbf16>
    %cst_45 = arith.constant dense<0.000000e+00> : vector<8x128xf32>
    %82 = tpu.matmul %79, %81, %cst_45 {dimension_numbers = #tpu.dot_dimension_numbers<[1], [0], [0], [1], [0, 0, 1, 1], [], []>} : vector<8x128xbf16>, vector<128x128xbf16>, vector<8x128xf32> -> vector<8x128xf32>
    %c7_46 = arith.constant 7 : index
    %c0_47 = arith.constant 0 : index
    %83 = vector.load %arg3[%c7_46, %c0_47] : memref<18x128xf32, #tpu.memory_space<vmem>>, vector<1x128xf32>
    %84 = vector.shape_cast %83 : vector<1x128xf32> to vector<128xf32>
    %85 = vector.shape_cast %84 : vector<128xf32> to vector<1x128xf32>
    %86 = vector.broadcast %85 : vector<1x128xf32> to vector<8x128xf32>
    %87 = arith.addf %82, %86 : vector<8x128xf32>
    %cst_48 = arith.constant 0.000000e+00 : f32
    %88 = vector.broadcast %cst_48 : f32 to vector<8x128xf32>
    %89 = arith.maximumf %87, %88 : vector<8x128xf32>
    %90 = arith.truncf %89 : vector<8x128xf32> to vector<8x128xbf16>
    %c8 = arith.constant 8 : index
    %c0_49 = arith.constant 0 : index
    %c0_50 = arith.constant 0 : index
    %91 = vector.load %arg2[%c8, %c0_49, %c0_50] : memref<18x128x128xbf16, #tpu.memory_space<vmem>>, vector<1x128x128xbf16>
    %92 = vector.shape_cast %91 : vector<1x128x128xbf16> to vector<128x128xbf16>
    %cst_51 = arith.constant dense<0.000000e+00> : vector<8x128xf32>
    %93 = tpu.matmul %90, %92, %cst_51 {dimension_numbers = #tpu.dot_dimension_numbers<[1], [0], [0], [1], [0, 0, 1, 1], [], []>} : vector<8x128xbf16>, vector<128x128xbf16>, vector<8x128xf32> -> vector<8x128xf32>
    %c8_52 = arith.constant 8 : index
    %c0_53 = arith.constant 0 : index
    %94 = vector.load %arg3[%c8_52, %c0_53] : memref<18x128xf32, #tpu.memory_space<vmem>>, vector<1x128xf32>
    %95 = vector.shape_cast %94 : vector<1x128xf32> to vector<128xf32>
    %96 = vector.shape_cast %95 : vector<128xf32> to vector<1x128xf32>
    %97 = vector.broadcast %96 : vector<1x128xf32> to vector<8x128xf32>
    %98 = arith.addf %93, %97 : vector<8x128xf32>
    %cst_54 = arith.constant 0.000000e+00 : f32
    %99 = vector.broadcast %cst_54 : f32 to vector<8x128xf32>
    %100 = arith.maximumf %98, %99 : vector<8x128xf32>
    %101 = arith.truncf %100 : vector<8x128xf32> to vector<8x128xbf16>
    %c9 = arith.constant 9 : index
    %c0_55 = arith.constant 0 : index
    %c0_56 = arith.constant 0 : index
    %102 = vector.load %arg2[%c9, %c0_55, %c0_56] : memref<18x128x128xbf16, #tpu.memory_space<vmem>>, vector<1x128x128xbf16>
    %103 = vector.shape_cast %102 : vector<1x128x128xbf16> to vector<128x128xbf16>
    %cst_57 = arith.constant dense<0.000000e+00> : vector<8x128xf32>
    %104 = tpu.matmul %101, %103, %cst_57 {dimension_numbers = #tpu.dot_dimension_numbers<[1], [0], [0], [1], [0, 0, 1, 1], [], []>} : vector<8x128xbf16>, vector<128x128xbf16>, vector<8x128xf32> -> vector<8x128xf32>
    %c9_58 = arith.constant 9 : index
    %c0_59 = arith.constant 0 : index
    %105 = vector.load %arg3[%c9_58, %c0_59] : memref<18x128xf32, #tpu.memory_space<vmem>>, vector<1x128xf32>
    %106 = vector.shape_cast %105 : vector<1x128xf32> to vector<128xf32>
    %107 = vector.shape_cast %106 : vector<128xf32> to vector<1x128xf32>
    %108 = vector.broadcast %107 : vector<1x128xf32> to vector<8x128xf32>
    %109 = arith.addf %104, %108 : vector<8x128xf32>
    %cst_60 = arith.constant 0.000000e+00 : f32
    %110 = vector.broadcast %cst_60 : f32 to vector<8x128xf32>
    %111 = arith.maximumf %109, %110 : vector<8x128xf32>
    %112 = arith.truncf %111 : vector<8x128xf32> to vector<8x128xbf16>
    %c10 = arith.constant 10 : index
    %c0_61 = arith.constant 0 : index
    %c0_62 = arith.constant 0 : index
    %113 = vector.load %arg2[%c10, %c0_61, %c0_62] : memref<18x128x128xbf16, #tpu.memory_space<vmem>>, vector<1x128x128xbf16>
    %114 = vector.shape_cast %113 : vector<1x128x128xbf16> to vector<128x128xbf16>
    %cst_63 = arith.constant dense<0.000000e+00> : vector<8x128xf32>
    %115 = tpu.matmul %112, %114, %cst_63 {dimension_numbers = #tpu.dot_dimension_numbers<[1], [0], [0], [1], [0, 0, 1, 1], [], []>} : vector<8x128xbf16>, vector<128x128xbf16>, vector<8x128xf32> -> vector<8x128xf32>
    %c10_64 = arith.constant 10 : index
    %c0_65 = arith.constant 0 : index
    %116 = vector.load %arg3[%c10_64, %c0_65] : memref<18x128xf32, #tpu.memory_space<vmem>>, vector<1x128xf32>
    %117 = vector.shape_cast %116 : vector<1x128xf32> to vector<128xf32>
    %118 = vector.shape_cast %117 : vector<128xf32> to vector<1x128xf32>
    %119 = vector.broadcast %118 : vector<1x128xf32> to vector<8x128xf32>
    %120 = arith.addf %115, %119 : vector<8x128xf32>
    %cst_66 = arith.constant 0.000000e+00 : f32
    %121 = vector.broadcast %cst_66 : f32 to vector<8x128xf32>
    %122 = arith.maximumf %120, %121 : vector<8x128xf32>
    %123 = arith.truncf %122 : vector<8x128xf32> to vector<8x128xbf16>
    %c11 = arith.constant 11 : index
    %c0_67 = arith.constant 0 : index
    %c0_68 = arith.constant 0 : index
    %124 = vector.load %arg2[%c11, %c0_67, %c0_68] : memref<18x128x128xbf16, #tpu.memory_space<vmem>>, vector<1x128x128xbf16>
    %125 = vector.shape_cast %124 : vector<1x128x128xbf16> to vector<128x128xbf16>
    %cst_69 = arith.constant dense<0.000000e+00> : vector<8x128xf32>
    %126 = tpu.matmul %123, %125, %cst_69 {dimension_numbers = #tpu.dot_dimension_numbers<[1], [0], [0], [1], [0, 0, 1, 1], [], []>} : vector<8x128xbf16>, vector<128x128xbf16>, vector<8x128xf32> -> vector<8x128xf32>
    %c11_70 = arith.constant 11 : index
    %c0_71 = arith.constant 0 : index
    %127 = vector.load %arg3[%c11_70, %c0_71] : memref<18x128xf32, #tpu.memory_space<vmem>>, vector<1x128xf32>
    %128 = vector.shape_cast %127 : vector<1x128xf32> to vector<128xf32>
    %129 = vector.shape_cast %128 : vector<128xf32> to vector<1x128xf32>
    %130 = vector.broadcast %129 : vector<1x128xf32> to vector<8x128xf32>
    %131 = arith.addf %126, %130 : vector<8x128xf32>
    %cst_72 = arith.constant 0.000000e+00 : f32
    %132 = vector.broadcast %cst_72 : f32 to vector<8x128xf32>
    %133 = arith.maximumf %131, %132 : vector<8x128xf32>
    %134 = arith.truncf %133 : vector<8x128xf32> to vector<8x128xbf16>
    %c12 = arith.constant 12 : index
    %c0_73 = arith.constant 0 : index
    %c0_74 = arith.constant 0 : index
    %135 = vector.load %arg2[%c12, %c0_73, %c0_74] : memref<18x128x128xbf16, #tpu.memory_space<vmem>>, vector<1x128x128xbf16>
    %136 = vector.shape_cast %135 : vector<1x128x128xbf16> to vector<128x128xbf16>
    %cst_75 = arith.constant dense<0.000000e+00> : vector<8x128xf32>
    %137 = tpu.matmul %134, %136, %cst_75 {dimension_numbers = #tpu.dot_dimension_numbers<[1], [0], [0], [1], [0, 0, 1, 1], [], []>} : vector<8x128xbf16>, vector<128x128xbf16>, vector<8x128xf32> -> vector<8x128xf32>
    %c12_76 = arith.constant 12 : index
    %c0_77 = arith.constant 0 : index
    %138 = vector.load %arg3[%c12_76, %c0_77] : memref<18x128xf32, #tpu.memory_space<vmem>>, vector<1x128xf32>
    %139 = vector.shape_cast %138 : vector<1x128xf32> to vector<128xf32>
    %140 = vector.shape_cast %139 : vector<128xf32> to vector<1x128xf32>
    %141 = vector.broadcast %140 : vector<1x128xf32> to vector<8x128xf32>
    %142 = arith.addf %137, %141 : vector<8x128xf32>
    %cst_78 = arith.constant 0.000000e+00 : f32
    %143 = vector.broadcast %cst_78 : f32 to vector<8x128xf32>
    %144 = arith.maximumf %142, %143 : vector<8x128xf32>
    %145 = arith.truncf %144 : vector<8x128xf32> to vector<8x128xbf16>
    %c13 = arith.constant 13 : index
    %c0_79 = arith.constant 0 : index
    %c0_80 = arith.constant 0 : index
    %146 = vector.load %arg2[%c13, %c0_79, %c0_80] : memref<18x128x128xbf16, #tpu.memory_space<vmem>>, vector<1x128x128xbf16>
    %147 = vector.shape_cast %146 : vector<1x128x128xbf16> to vector<128x128xbf16>
    %cst_81 = arith.constant dense<0.000000e+00> : vector<8x128xf32>
    %148 = tpu.matmul %145, %147, %cst_81 {dimension_numbers = #tpu.dot_dimension_numbers<[1], [0], [0], [1], [0, 0, 1, 1], [], []>} : vector<8x128xbf16>, vector<128x128xbf16>, vector<8x128xf32> -> vector<8x128xf32>
    %c13_82 = arith.constant 13 : index
    %c0_83 = arith.constant 0 : index
    %149 = vector.load %arg3[%c13_82, %c0_83] : memref<18x128xf32, #tpu.memory_space<vmem>>, vector<1x128xf32>
    %150 = vector.shape_cast %149 : vector<1x128xf32> to vector<128xf32>
    %151 = vector.shape_cast %150 : vector<128xf32> to vector<1x128xf32>
    %152 = vector.broadcast %151 : vector<1x128xf32> to vector<8x128xf32>
    %153 = arith.addf %148, %152 : vector<8x128xf32>
    %cst_84 = arith.constant 0.000000e+00 : f32
    %154 = vector.broadcast %cst_84 : f32 to vector<8x128xf32>
    %155 = arith.maximumf %153, %154 : vector<8x128xf32>
    %156 = arith.truncf %155 : vector<8x128xf32> to vector<8x128xbf16>
    %c14 = arith.constant 14 : index
    %c0_85 = arith.constant 0 : index
    %c0_86 = arith.constant 0 : index
    %157 = vector.load %arg2[%c14, %c0_85, %c0_86] : memref<18x128x128xbf16, #tpu.memory_space<vmem>>, vector<1x128x128xbf16>
    %158 = vector.shape_cast %157 : vector<1x128x128xbf16> to vector<128x128xbf16>
    %cst_87 = arith.constant dense<0.000000e+00> : vector<8x128xf32>
    %159 = tpu.matmul %156, %158, %cst_87 {dimension_numbers = #tpu.dot_dimension_numbers<[1], [0], [0], [1], [0, 0, 1, 1], [], []>} : vector<8x128xbf16>, vector<128x128xbf16>, vector<8x128xf32> -> vector<8x128xf32>
    %c14_88 = arith.constant 14 : index
    %c0_89 = arith.constant 0 : index
    %160 = vector.load %arg3[%c14_88, %c0_89] : memref<18x128xf32, #tpu.memory_space<vmem>>, vector<1x128xf32>
    %161 = vector.shape_cast %160 : vector<1x128xf32> to vector<128xf32>
    %162 = vector.shape_cast %161 : vector<128xf32> to vector<1x128xf32>
    %163 = vector.broadcast %162 : vector<1x128xf32> to vector<8x128xf32>
    %164 = arith.addf %159, %163 : vector<8x128xf32>
    %cst_90 = arith.constant 0.000000e+00 : f32
    %165 = vector.broadcast %cst_90 : f32 to vector<8x128xf32>
    %166 = arith.maximumf %164, %165 : vector<8x128xf32>
    %167 = arith.truncf %166 : vector<8x128xf32> to vector<8x128xbf16>
    %c15 = arith.constant 15 : index
    %c0_91 = arith.constant 0 : index
    %c0_92 = arith.constant 0 : index
    %168 = vector.load %arg2[%c15, %c0_91, %c0_92] : memref<18x128x128xbf16, #tpu.memory_space<vmem>>, vector<1x128x128xbf16>
    %169 = vector.shape_cast %168 : vector<1x128x128xbf16> to vector<128x128xbf16>
    %cst_93 = arith.constant dense<0.000000e+00> : vector<8x128xf32>
    %170 = tpu.matmul %167, %169, %cst_93 {dimension_numbers = #tpu.dot_dimension_numbers<[1], [0], [0], [1], [0, 0, 1, 1], [], []>} : vector<8x128xbf16>, vector<128x128xbf16>, vector<8x128xf32> -> vector<8x128xf32>
    %c15_94 = arith.constant 15 : index
    %c0_95 = arith.constant 0 : index
    %171 = vector.load %arg3[%c15_94, %c0_95] : memref<18x128xf32, #tpu.memory_space<vmem>>, vector<1x128xf32>
    %172 = vector.shape_cast %171 : vector<1x128xf32> to vector<128xf32>
    %173 = vector.shape_cast %172 : vector<128xf32> to vector<1x128xf32>
    %174 = vector.broadcast %173 : vector<1x128xf32> to vector<8x128xf32>
    %175 = arith.addf %170, %174 : vector<8x128xf32>
    %cst_96 = arith.constant 0.000000e+00 : f32
    %176 = vector.broadcast %cst_96 : f32 to vector<8x128xf32>
    %177 = arith.maximumf %175, %176 : vector<8x128xf32>
    %178 = arith.truncf %177 : vector<8x128xf32> to vector<8x128xbf16>
    %c16 = arith.constant 16 : index
    %c0_97 = arith.constant 0 : index
    %c0_98 = arith.constant 0 : index
    %179 = vector.load %arg2[%c16, %c0_97, %c0_98] : memref<18x128x128xbf16, #tpu.memory_space<vmem>>, vector<1x128x128xbf16>
    %180 = vector.shape_cast %179 : vector<1x128x128xbf16> to vector<128x128xbf16>
    %cst_99 = arith.constant dense<0.000000e+00> : vector<8x128xf32>
    %181 = tpu.matmul %178, %180, %cst_99 {dimension_numbers = #tpu.dot_dimension_numbers<[1], [0], [0], [1], [0, 0, 1, 1], [], []>} : vector<8x128xbf16>, vector<128x128xbf16>, vector<8x128xf32> -> vector<8x128xf32>
    %c16_100 = arith.constant 16 : index
    %c0_101 = arith.constant 0 : index
    %182 = vector.load %arg3[%c16_100, %c0_101] : memref<18x128xf32, #tpu.memory_space<vmem>>, vector<1x128xf32>
    %183 = vector.shape_cast %182 : vector<1x128xf32> to vector<128xf32>
    %184 = vector.shape_cast %183 : vector<128xf32> to vector<1x128xf32>
    %185 = vector.broadcast %184 : vector<1x128xf32> to vector<8x128xf32>
    %186 = arith.addf %181, %185 : vector<8x128xf32>
    %cst_102 = arith.constant 0.000000e+00 : f32
    %187 = vector.broadcast %cst_102 : f32 to vector<8x128xf32>
    %188 = arith.maximumf %186, %187 : vector<8x128xf32>
    %189 = arith.truncf %188 : vector<8x128xf32> to vector<8x128xbf16>
    %c17 = arith.constant 17 : index
    %c0_103 = arith.constant 0 : index
    %c0_104 = arith.constant 0 : index
    %190 = vector.load %arg2[%c17, %c0_103, %c0_104] : memref<18x128x128xbf16, #tpu.memory_space<vmem>>, vector<1x128x128xbf16>
    %191 = vector.shape_cast %190 : vector<1x128x128xbf16> to vector<128x128xbf16>
    %cst_105 = arith.constant dense<0.000000e+00> : vector<8x128xf32>
    %192 = tpu.matmul %189, %191, %cst_105 {dimension_numbers = #tpu.dot_dimension_numbers<[1], [0], [0], [1], [0, 0, 1, 1], [], []>} : vector<8x128xbf16>, vector<128x128xbf16>, vector<8x128xf32> -> vector<8x128xf32>
    %c17_106 = arith.constant 17 : index
    %c0_107 = arith.constant 0 : index
    %193 = vector.load %arg3[%c17_106, %c0_107] : memref<18x128xf32, #tpu.memory_space<vmem>>, vector<1x128xf32>
    %194 = vector.shape_cast %193 : vector<1x128xf32> to vector<128xf32>
    %195 = vector.shape_cast %194 : vector<128xf32> to vector<1x128xf32>
    %196 = vector.broadcast %195 : vector<1x128xf32> to vector<8x128xf32>
    %197 = arith.addf %192, %196 : vector<8x128xf32>
    %cst_108 = arith.constant 0.000000e+00 : f32
    %198 = vector.broadcast %cst_108 : f32 to vector<8x128xf32>
    %199 = arith.maximumf %197, %198 : vector<8x128xf32>
    %200 = vector.extract_strided_slice %199 {offsets = [0, 0], sizes = [8, 10], strides = [1, 1]} : vector<8x128xf32> to vector<8x10xf32>
    %c0_109 = arith.constant 0 : index
    %c0_110 = arith.constant 0 : index
    %201 = vector.load %arg4[%c0_109, %c0_110] : memref<8x10xf32, #tpu.memory_space<vmem>>, vector<8x10xf32>
    tpu.vector_store %arg4[%c0_109, %c0_110], %200 {strides = array<i32>} : memref<8x10xf32, #tpu.memory_space<vmem>>, vector<8x10xf32>,
    return
  }
  func.func @transform_0(%arg0: i32) -> (i32, i32) {
    %c0_i32 = arith.constant 0 : i32
    %c0_i32_0 = arith.constant 0 : i32
    return %arg0, %c0_i32 : i32, i32
  }
  func.func @transform_1(%arg0: i32) -> (i32, i32, i32) {
    %c0_i32 = arith.constant 0 : i32
    %c0_i32_0 = arith.constant 0 : i32
    %c0_i32_1 = arith.constant 0 : i32
    %c0_i32_2 = arith.constant 0 : i32
    return %c0_i32, %c0_i32_0, %c0_i32_1 : i32, i32, i32
  }
  func.func @transform_2(%arg0: i32) -> (i32, i32) {
    %c0_i32 = arith.constant 0 : i32
    %c0_i32_0 = arith.constant 0 : i32
    %c0_i32_1 = arith.constant 0 : i32
    return %c0_i32, %c0_i32_0 : i32, i32
  }
  func.func @transform_3(%arg0: i32) -> (i32, i32) {
    %c0_i32 = arith.constant 0 : i32
    %c0_i32_0 = arith.constant 0 : i32
    return %arg0, %c0_i32 : i32, i32
  }
}

</mosaic_0001>

<llo_original>
// kernel: autoencoder_forward.1
$region0: #{autoencoder_forward.1}
  #allocation0 [shape = 'u32[]', space=smem, size = 0x4, offset = 0x4, fixed_abs, tag = 'smem constant byte address 0x4 - core index']
  #allocation1 [shape = 'u32[144,128]{1,0:T(1,128)}', space=vmem, size = 0x12000, scoped, tag = 'internal scratch']
  %s0 = inlined_call_operand.vmem [shape: f32[8,16], index: 0, kind: input, shape index: {}]
  %s1 = inlined_call_operand.hbm [shape: bf16[18,128,128], index: 1, kind: input, shape index: {}]
  %s2 = inlined_call_operand.hbm [shape: f32[18,128], index: 2, kind: input, shape index: {}]
  %s3 = inlined_call_operand.vmem [shape: f32[8,10], index: 3, kind: output, shape index: {}]
  %s4 = sld [smem:[#allocation0]]
  $region30: #{autoencoder_forward.1} parent=0
    _
  %s6 = ssub.s32 1, %s4
  %s7 = scalar_select 0, %s6, %s4
  $region1: #{autoencoder_forward.1} parent=0
    #allocation2 [shape = 'u8[589824]{0}', space=vmem, size = 0x90000, scoped, tag = 'input window, operand 1, single buffered']
    #allocation3 [shape = 's32[1]{0}', space=sflag, size = 0x4, scoped, tag = 'scoped memory for autoencoder_forward.1']
    #allocation4 [shape = 'u8[12288]{0}', space=vmem, size = 0x3000, scoped, tag = 'input window, operand 2, single buffered']
    #allocation5 [shape = 's32[1]{0}', space=sflag, size = 0x4, scoped, tag = 'scoped memory for autoencoder_forward.1']
    %8 = vsyncpa [#allocation3], 0
    %9 = vsyncpa [#allocation5], 0
    // Predicated region
    $region2: #{autoencoder_forward.1} parent=1 // pred_check
      _
    $region3: #{autoencoder_forward.1} parent=1 // pred_check_branch
      %11 = sbr.rel (0) target = $region5
    $region4: #{autoencoder_forward.1} parent=1 // pred_region
      _
    $region5: #{autoencoder_forward.1} parent=1 // pred_fallthru
      _
    // Predicated region
    $region6: #{autoencoder_forward.1} parent=1 // pred_check
      _
    $region7: #{autoencoder_forward.1} parent=1 // pred_check_branch
      %13 = sbr.rel (0) target = $region9
    $region8: #{autoencoder_forward.1} parent=1 // pred_region
      %s15 = ssub.s32 18432, 18432
      %16 = vsyncadd [#allocation3], %s15
      %s17 = sshll.u32 [#allocation2], 4
      %s18 = int_to_ptr.vmem [resolvable:$true] %s17
      %23 = dma.hbm_to_vmem [thread:$0]  %s1, 18432, %s18, [#allocation3], 64, 64, 4
    $region9: #{autoencoder_forward.1} parent=1 // pred_fallthru
      _
    // Predicated region
    $region10: #{autoencoder_forward.1} parent=1 // pred_check
      _
    $region11: #{autoencoder_forward.1} parent=1 // pred_check_branch
      %25 = sbr.rel (0) target = $region13
    $region12: #{autoencoder_forward.1} parent=1 // pred_region
      %s27 = ssub.s32 384, 384
      %28 = vsyncadd [#allocation5], %s27
      %s29 = sshll.u32 [#allocation4], 4
      %s30 = int_to_ptr.vmem [resolvable:$true] %s29
      %35 = dma.hbm_to_vmem [thread:$0]  %s2, 384, %s30, [#allocation5], 128, 128, 8
    $region13: #{autoencoder_forward.1} parent=1 // pred_fallthru
      _
    // Predicated region
    $region14: #{autoencoder_forward.1} parent=1 // pred_check
      _
    $region15: #{autoencoder_forward.1} parent=1 // pred_check_branch
      %37 = sbr.rel (0) target = $region17
    $region16: #{autoencoder_forward.1} parent=1 // pred_region
      %38 = dma.done [#allocation3], 18432
    $region17: #{autoencoder_forward.1} parent=1 // pred_fallthru
      _
    // Predicated region
    $region18: #{autoencoder_forward.1} parent=1 // pred_check
      _
    $region19: #{autoencoder_forward.1} parent=1 // pred_check_branch
      %40 = sbr.rel (0) target = $region21
    $region20: #{autoencoder_forward.1} parent=1 // pred_region
      %41 = dma.done [#allocation5], 384
    $region21: #{autoencoder_forward.1} parent=1 // pred_fallthru
      _
    %v43 = vld [vmem:[%s0] sm:$0xff]
    %v44 = vpack.c.bf16 %v43, %v43
    %v45 = vld [vmem:[#allocation2] sm:$0xf]
    %v46 = vld [vmem:[#allocation2 + $0x4] sm:$0xf]
    %v47 = vld [vmem:[#allocation4] sm:$0x1]
    %v48 = vlaneseq
    %v49 = vshrl.u32 %v48, 7
    %v50 = vsub.s32 0, %v49
    %v51 = vrot.slane %v47, %v50
    %v54 = vunpack.c.l.b16 %v45
    %v55 = vunpack.c.l.b16 %v46
    %v56 = vpack.c.b16 %v55, %v54
    %vm58 = vcmask 130048
    %v60 = vsel %vm58, %v44, 0
    %62 = vmatprep.subr.bf16.mxu0 0
    %63 = vmatpush1.bf16.msra.mxu0 0
    %64 = vmatprep.subr.bf16.mxu0 0
    %65 = vmatpush1.bf16.msra.mxu0 0
    %66 = vmatprep.subr.bf16.mxu0 0
    %67 = vmatpush1.bf16.msra.mxu0 0
    %68 = vmatprep.subr.bf16.mxu0 0
    %69 = vmatpush1.bf16.msra.mxu0 0
    %70 = vmatprep.subr.bf16.mxu0 0
    %71 = vmatpush1.bf16.msra.mxu0 0
    %72 = vmatprep.subr.bf16.mxu0 0
    %73 = vmatpush1.bf16.msra.mxu0 0
    %74 = vmatprep.subr.bf16.mxu0 0
    %75 = vmatpush1.bf16.msra.mxu0 0
    %76 = vmatprep.subr.bf16.mxu0 0
    %77 = vmatpush1.bf16.msra.mxu0 %v56
    %78 = vmatprep.subr.bf16.mxu0 0
    %79 = vmatpush2.bf16.msra.mxu0 0
    %80 = vmatprep.subr.bf16.mxu0 0
    %81 = vmatpush2.bf16.msra.mxu0 0
    %82 = vmatprep.subr.bf16.mxu0 0
    %83 = vmatpush2.bf16.msra.mxu0 0
    %84 = vmatprep.subr.bf16.mxu0 0
    %85 = vmatpush2.bf16.msra.mxu0 0
    %86 = vmatprep.subr.bf16.mxu0 0
    %87 = vmatpush2.bf16.msra.mxu0 0
    %88 = vmatprep.subr.bf16.mxu0 0
    %89 = vmatpush2.bf16.msra.mxu0 0
    %90 = vmatprep.subr.bf16.mxu0 0
    %91 = vmatpush2.bf16.msra.mxu0 0
    %92 = vmatprep.subr.bf16.mxu0 0
    %93 = vmatpush2.bf16.msra.mxu0 0
    %94 = vmatprep.mubr.bf16.mxu0 0
    %95 = vmatmul.mubr.bf16.gmra.mxu0 %v60
    %v96 = vpop.f32.mrf.mxu0
    %v97 = vadd.f32 %v51, %v96
    %v98 = vpop.f32.mrf.mxu0
    %v99 = vpop.f32.mrf.mxu0
    %v100 = vpop.f32.mrf.mxu0
    %101 = vdwg.mxu0
    %v102 = vmax.f32 %v97, 0.0
    %v103 = vpack.c.bf16 %v102, %v102
    %s104 = scalar_lea.vmem [#allocation2], 64
    %v105 = vld [vmem:[%s104] sm:$0xf]
    %v106 = vld [vmem:[%s104 + $0x4] sm:$0xf]
    %v107 = vld [vmem:[%s104 + $0x8] sm:$0xf]
    %v108 = vld [vmem:[%s104 + $0xc] sm:$0xf]
    %v109 = vld [vmem:[%s104 + $0x10] sm:$0xf]
    %v110 = vld [vmem:[%s104 + $0x14] sm:$0xf]
    %v111 = vld [vmem:[%s104 + $0x18] sm:$0xf]
    %v112 = vld [vmem:[%s104 + $0x1c] sm:$0xf]
    %v113 = vld [vmem:[%s104 + $0x20] sm:$0xf]
    %v114 = vld [vmem:[%s104 + $0x24] sm:$0xf]
    %v115 = vld [vmem:[%s104 + $0x28] sm:$0xf]
    %v116 = vld [vmem:[%s104 + $0x2c] sm:$0xf]
    %v117 = vld [vmem:[%s104 + $0x30] sm:$0xf]
    %v118 = vld [vmem:[%s104 + $0x34] sm:$0xf]
    %v119 = vld [vmem:[%s104 + $0x38] sm:$0xf]
    %v120 = vld [vmem:[%s104 + $0x3c] sm:$0xf]
    %v121 = vld [vmem:[#allocation4 + $0x1] sm:$0x1]
    %v122 = vlaneseq
    %v123 = vshrl.u32 %v122, 7
    %v124 = vsub.s32 0, %v123
    %v125 = vrot.slane %v121, %v124
    %v142 = vunpack.c.l.b16 %v105
    %v143 = vunpack.c.l.b16 %v106
    %v144 = vunpack.c.l.b16 %v107
    %v145 = vunpack.c.l.b16 %v108
    %v146 = vunpack.c.l.b16 %v109
    %v147 = vunpack.c.l.b16 %v110
    %v148 = vunpack.c.l.b16 %v111
    %v149 = vunpack.c.l.b16 %v112
    %v150 = vunpack.c.l.b16 %v113
    %v151 = vunpack.c.l.b16 %v114
    %v152 = vunpack.c.l.b16 %v115
    %v153 = vunpack.c.l.b16 %v116
    %v154 = vunpack.c.l.b16 %v117
    %v155 = vunpack.c.l.b16 %v118
    %v156 = vunpack.c.l.b16 %v119
    %v157 = vunpack.c.l.b16 %v120
    %v158 = vpack.c.b16 %v143, %v142
    %v159 = vpack.c.b16 %v145, %v144
    %v160 = vpack.c.b16 %v147, %v146
    %v161 = vpack.c.b16 %v149, %v148
    %v162 = vpack.c.b16 %v151, %v150
    %v163 = vpack.c.b16 %v153, %v152
    %v164 = vpack.c.b16 %v155, %v154
    %v165 = vpack.c.b16 %v157, %v156
    %174 = vmatprep.subr.bf16.mxu0 0
    %175 = vmatpush1.bf16.msra.mxu0 %v165
    %176 = vmatprep.subr.bf16.mxu0 0
    %177 = vmatpush1.bf16.msra.mxu0 %v164
    %178 = vmatprep.subr.bf16.mxu0 0
    %179 = vmatpush1.bf16.msra.mxu0 %v163
    %180 = vmatprep.subr.bf16.mxu0 0
    %181 = vmatpush1.bf16.msra.mxu0 %v162
    %182 = vmatprep.subr.bf16.mxu0 0
    %183 = vmatpush1.bf16.msra.mxu0 %v161
    %184 = vmatprep.subr.bf16.mxu0 0
    %185 = vmatpush1.bf16.msra.mxu0 %v160
    %186 = vmatprep.subr.bf16.mxu0 0
    %187 = vmatpush1.bf16.msra.mxu0 %v159
    %188 = vmatprep.subr.bf16.mxu0 0
    %189 = vmatpush1.bf16.msra.mxu0 %v158
    %190 = vmatprep.subr.bf16.mxu0 0
    %191 = vmatpush2.bf16.msra.mxu0 0
    %192 = vmatprep.subr.bf16.mxu0 0
    %193 = vmatpush2.bf16.msra.mxu0 0
    %194 = vmatprep.subr.bf16.mxu0 0
    %195 = vmatpush2.bf16.msra.mxu0 0
    %196 = vmatprep.subr.bf16.mxu0 0
    %197 = vmatpush2.bf16.msra.mxu0 0
    %198 = vmatprep.subr.bf16.mxu0 0
    %199 = vmatpush2.bf16.msra.mxu0 0
    %200 = vmatprep.subr.bf16.mxu0 0
    %201 = vmatpush2.bf16.msra.mxu0 0
    %202 = vmatprep.subr.bf16.mxu0 0
    %203 = vmatpush2.bf16.msra.mxu0 0
    %204 = vmatprep.subr.bf16.mxu0 0
    %205 = vmatpush2.bf16.msra.mxu0 0
    %206 = vmatprep.mubr.bf16.mxu0 0
    %207 = vmatmul.mubr.bf16.gmra.mxu0 %v103
    %v208 = vpop.f32.mrf.mxu0
    %v209 = vadd.f32 %v125, %v208
    %v210 = vpop.f32.mrf.mxu0
    %v211 = vpop.f32.mrf.mxu0
    %v212 = vpop.f32.mrf.mxu0
    %213 = vdwg.mxu0
    %v214 = vmax.f32 %v209, 0.0
    %v215 = vpack.c.bf16 %v214, %v214
    %s216 = scalar_lea.vmem [#allocation2], 128
    %v217 = vld [vmem:[%s216] sm:$0xf]
    %v218 = vld [vmem:[%s216 + $0x4] sm:$0xf]
    %v219 = vld [vmem:[%s216 + $0x8] sm:$0xf]
    %v220 = vld [vmem:[%s216 + $0xc] sm:$0xf]
    %v221 = vld [vmem:[%s216 + $0x10] sm:$0xf]
    %v222 = vld [vmem:[%s216 + $0x14] sm:$0xf]
    %v223 = vld [vmem:[%s216 + $0x18] sm:$0xf]
    %v224 = vld [vmem:[%s216 + $0x1c] sm:$0xf]
    %v225 = vld [vmem:[%s216 + $0x20] sm:$0xf]
    %v226 = vld [vmem:[%s216 + $0x24] sm:$0xf]
    %v227 = vld [vmem:[%s216 + $0x28] sm:$0xf]
    %v228 = vld [vmem:[%s216 + $0x2c] sm:$0xf]
    %v229 = vld [vmem:[%s216 + $0x30] sm:$0xf]
    %v230 = vld [vmem:[%s216 + $0x34] sm:$0xf]
    %v231 = vld [vmem:[%s216 + $0x38] sm:$0xf]
    %v232 = vld [vmem:[%s216 + $0x3c] sm:$0xf]
    %v233 = vld [vmem:[#allocation4 + $0x2] sm:$0x1]
    %v234 = vlaneseq
    %v235 = vshrl.u32 %v234, 7
    %v236 = vsub.s32 0, %v235
    %v237 = vrot.slane %v233, %v236
    %v254 = vunpack.c.l.b16 %v217
    %v255 = vunpack.c.l.b16 %v218
    %v256 = vunpack.c.l.b16 %v219
    %v257 = vunpack.c.l.b16 %v220
    %v258 = vunpack.c.l.b16 %v221
    %v259 = vunpack.c.l.b16 %v222
    %v260 = vunpack.c.l.b16 %v223
    %v261 = vunpack.c.l.b16 %v224
    %v262 = vunpack.c.l.b16 %v225
    %v263 = vunpack.c.l.b16 %v226
    %v264 = vunpack.c.l.b16 %v227
    %v265 = vunpack.c.l.b16 %v228
    %v266 = vunpack.c.l.b16 %v229
    %v267 = vunpack.c.l.b16 %v230
    %v268 = vunpack.c.l.b16 %v231
    %v269 = vunpack.c.l.b16 %v232
    %v270 = vpack.c.b16 %v255, %v254
    %v271 = vpack.c.b16 %v257, %v256
    %v272 = vpack.c.b16 %v259, %v258
    %v273 = vpack.c.b16 %v261, %v260
    %v274 = vpack.c.b16 %v263, %v262
    %v275 = vpack.c.b16 %v265, %v264
    %v276 = vpack.c.b16 %v267, %v266
    %v277 = vpack.c.b16 %v269, %v268
    %286 = vmatprep.subr.bf16.mxu0 0
    %287 = vmatpush1.bf16.msra.mxu0 %v277
    %288 = vmatprep.subr.bf16.mxu0 0
    %289 = vmatpush1.bf16.msra.mxu0 %v276
    %290 = vmatprep.subr.bf16.mxu0 0
    %291 = vmatpush1.bf16.msra.mxu0 %v275
    %292 = vmatprep.subr.bf16.mxu0 0
    %293 = vmatpush1.bf16.msra.mxu0 %v274
    %294 = vmatprep.subr.bf16.mxu0 0
    %295 = vmatpush1.bf16.msra.mxu0 %v273
    %296 = vmatprep.subr.bf16.mxu0 0
    %297 = vmatpush1.bf16.msra.mxu0 %v272
    %298 = vmatprep.subr.bf16.mxu0 0
    %299 = vmatpush1.bf16.msra.mxu0 %v271
    %300 = vmatprep.subr.bf16.mxu0 0
    %301 = vmatpush1.bf16.msra.mxu0 %v270
    %302 = vmatprep.subr.bf16.mxu0 0
    %303 = vmatpush2.bf16.msra.mxu0 0
    %304 = vmatprep.subr.bf16.mxu0 0
    %305 = vmatpush2.bf16.msra.mxu0 0
    %306 = vmatprep.subr.bf16.mxu0 0
    %307 = vmatpush2.bf16.msra.mxu0 0
    %308 = vmatprep.subr.bf16.mxu0 0
    %309 = vmatpush2.bf16.msra.mxu0 0
    %310 = vmatprep.subr.bf16.mxu0 0
    %311 = vmatpush2.bf16.msra.mxu0 0
    %312 = vmatprep.subr.bf16.mxu0 0
    %313 = vmatpush2.bf16.msra.mxu0 0
    %314 = vmatprep.subr.bf16.mxu0 0
    %315 = vmatpush2.bf16.msra.mxu0 0
    %316 = vmatprep.subr.bf16.mxu0 0
    %317 = vmatpush2.bf16.msra.mxu0 0
    %318 = vmatprep.mubr.bf16.mxu0 0
    %319 = vmatmul.mubr.bf16.gmra.mxu0 %v215
    %v320 = vpop.f32.mrf.mxu0
    %v321 = vadd.f32 %v237, %v320
    %v322 = vpop.f32.mrf.mxu0
    %v323 = vpop.f32.mrf.mxu0
    %v324 = vpop.f32.mrf.mxu0
    %325 = vdwg.mxu0
    %v326 = vmax.f32 %v321, 0.0
    %v327 = vpack.c.bf16 %v326, %v326
    %s328 = scalar_lea.vmem [#allocation2], 192
    %v329 = vld [vmem:[%s328] sm:$0xf]
    %v330 = vld [vmem:[%s328 + $0x4] sm:$0xf]
    %v331 = vld [vmem:[%s328 + $0x8] sm:$0xf]
    %v332 = vld [vmem:[%s328 + $0xc] sm:$0xf]
    %v333 = vld [vmem:[%s328 + $0x10] sm:$0xf]
    %v334 = vld [vmem:[%s328 + $0x14] sm:$0xf]
    %v335 = vld [vmem:[%s328 + $0x18] sm:$0xf]
    %v336 = vld [vmem:[%s328 + $0x1c] sm:$0xf]
    %v337 = vld [vmem:[%s328 + $0x20] sm:$0xf]
    %v338 = vld [vmem:[%s328 + $0x24] sm:$0xf]
    %v339 = vld [vmem:[%s328 + $0x28] sm:$0xf]
    %v340 = vld [vmem:[%s328 + $0x2c] sm:$0xf]
    %v341 = vld [vmem:[%s328 + $0x30] sm:$0xf]
    %v342 = vld [vmem:[%s328 + $0x34] sm:$0xf]
    %v343 = vld [vmem:[%s328 + $0x38] sm:$0xf]
    %v344 = vld [vmem:[%s328 + $0x3c] sm:$0xf]
    %v345 = vld [vmem:[#allocation4 + $0x3] sm:$0x1]
    %v346 = vlaneseq
    %v347 = vshrl.u32 %v346, 7
    %v348 = vsub.s32 0, %v347
    %v349 = vrot.slane %v345, %v348
    %v366 = vunpack.c.l.b16 %v329
    %v367 = vunpack.c.l.b16 %v330
    %v368 = vunpack.c.l.b16 %v331
    %v369 = vunpack.c.l.b16 %v332
    %v370 = vunpack.c.l.b16 %v333
    %v371 = vunpack.c.l.b16 %v334
    %v372 = vunpack.c.l.b16 %v335
    %v373 = vunpack.c.l.b16 %v336
    %v374 = vunpack.c.l.b16 %v337
    %v375 = vunpack.c.l.b16 %v338
    %v376 = vunpack.c.l.b16 %v339
    %v377 = vunpack.c.l.b16 %v340
    %v378 = vunpack.c.l.b16 %v341
    %v379 = vunpack.c.l.b16 %v342
    %v380 = vunpack.c.l.b16 %v343
    %v381 = vunpack.c.l.b16 %v344
    %v382 = vpack.c.b16 %v367, %v366
    %v383 = vpack.c.b16 %v369, %v368
    %v384 = vpack.c.b16 %v371, %v370
    %v385 = vpack.c.b16 %v373, %v372
    %v386 = vpack.c.b16 %v375, %v374
    %v387 = vpack.c.b16 %v377, %v376
    %v388 = vpack.c.b16 %v379, %v378
    %v389 = vpack.c.b16 %v381, %v380
    %398 = vmatprep.subr.bf16.mxu0 0
    %399 = vmatpush1.bf16.msra.mxu0 %v389
    %400 = vmatprep.subr.bf16.mxu0 0
    %401 = vmatpush1.bf16.msra.mxu0 %v388
    %402 = vmatprep.subr.bf16.mxu0 0
    %403 = vmatpush1.bf16.msra.mxu0 %v387
    %404 = vmatprep.subr.bf16.mxu0 0
    %405 = vmatpush1.bf16.msra.mxu0 %v386
    %406 = vmatprep.subr.bf16.mxu0 0
    %407 = vmatpush1.bf16.msra.mxu0 %v385
    %408 = vmatprep.subr.bf16.mxu0 0
    %409 = vmatpush1.bf16.msra.mxu0 %v384
    %410 = vmatprep.subr.bf16.mxu0 0
    %411 = vmatpush1.bf16.msra.mxu0 %v383
    %412 = vmatprep.subr.bf16.mxu0 0
    %413 = vmatpush1.bf16.msra.mxu0 %v382
    %414 = vmatprep.subr.bf16.mxu0 0
    %415 = vmatpush2.bf16.msra.mxu0 0
    %416 = vmatprep.subr.bf16.mxu0 0
    %417 = vmatpush2.bf16.msra.mxu0 0
    %418 = vmatprep.subr.bf16.mxu0 0
    %419 = vmatpush2.bf16.msra.mxu0 0
    %420 = vmatprep.subr.bf16.mxu0 0
    %421 = vmatpush2.bf16.msra.mxu0 0
    %422 = vmatprep.subr.bf16.mxu0 0
    %423 = vmatpush2.bf16.msra.mxu0 0
    %424 = vmatprep.subr.bf16.mxu0 0
    %425 = vmatpush2.bf16.msra.mxu0 0
    %426 = vmatprep.subr.bf16.mxu0 0
    %427 = vmatpush2.bf16.msra.mxu0 0
    %428 = vmatprep.subr.bf16.mxu0 0
    %429 = vmatpush2.bf16.msra.mxu0 0
    %430 = vmatprep.mubr.bf16.mxu0 0
    %431 = vmatmul.mubr.bf16.gmra.mxu0 %v327
    %v432 = vpop.f32.mrf.mxu0
    %v433 = vadd.f32 %v349, %v432
    %v434 = vpop.f32.mrf.mxu0
    %v435 = vpop.f32.mrf.mxu0
    %v436 = vpop.f32.mrf.mxu0
    %437 = vdwg.mxu0
    %v438 = vmax.f32 %v433, 0.0
    %v439 = vpack.c.bf16 %v438, %v438
    %s440 = scalar_lea.vmem [#allocation2], 256
    %v441 = vld [vmem:[%s440] sm:$0xf]
    %v442 = vld [vmem:[%s440 + $0x4] sm:$0xf]
    %v443 = vld [vmem:[%s440 + $0x8] sm:$0xf]
    %v444 = vld [vmem:[%s440 + $0xc] sm:$0xf]
    %v445 = vld [vmem:[%s440 + $0x10] sm:$0xf]
    %v446 = vld [vmem:[%s440 + $0x14] sm:$0xf]
    %v447 = vld [vmem:[%s440 + $0x18] sm:$0xf]
    %v448 = vld [vmem:[%s440 + $0x1c] sm:$0xf]
    %v449 = vld [vmem:[%s440 + $0x20] sm:$0xf]
    %v450 = vld [vmem:[%s440 + $0x24] sm:$0xf]
    %v451 = vld [vmem:[%s440 + $0x28] sm:$0xf]
    %v452 = vld [vmem:[%s440 + $0x2c] sm:$0xf]
    %v453 = vld [vmem:[%s440 + $0x30] sm:$0xf]
    %v454 = vld [vmem:[%s440 + $0x34] sm:$0xf]
    %v455 = vld [vmem:[%s440 + $0x38] sm:$0xf]
    %v456 = vld [vmem:[%s440 + $0x3c] sm:$0xf]
    %v457 = vld [vmem:[#allocation4 + $0x4] sm:$0x1]
    %v458 = vlaneseq
    %v459 = vshrl.u32 %v458, 7
    %v460 = vsub.s32 0, %v459
    %v461 = vrot.slane %v457, %v460
    %v478 = vunpack.c.l.b16 %v441
    %v479 = vunpack.c.l.b16 %v442
    %v480 = vunpack.c.l.b16 %v443
    %v481 = vunpack.c.l.b16 %v444
    %v482 = vunpack.c.l.b16 %v445
    %v483 = vunpack.c.l.b16 %v446
    %v484 = vunpack.c.l.b16 %v447
    %v485 = vunpack.c.l.b16 %v448
    %v486 = vunpack.c.l.b16 %v449
    %v487 = vunpack.c.l.b16 %v450
    %v488 = vunpack.c.l.b16 %v451
    %v489 = vunpack.c.l.b16 %v452
    %v490 = vunpack.c.l.b16 %v453
    %v491 = vunpack.c.l.b16 %v454
    %v492 = vunpack.c.l.b16 %v455
    %v493 = vunpack.c.l.b16 %v456
    %v494 = vpack.c.b16 %v479, %v478
    %v495 = vpack.c.b16 %v481, %v480
    %v496 = vpack.c.b16 %v483, %v482
    %v497 = vpack.c.b16 %v485, %v484
    %v498 = vpack.c.b16 %v487, %v486
    %v499 = vpack.c.b16 %v489, %v488
    %v500 = vpack.c.b16 %v491, %v490
    %v501 = vpack.c.b16 %v493, %v492
    %510 = vmatprep.subr.bf16.mxu0 0
    %511 = vmatpush1.bf16.msra.mxu0 %v501
    %512 = vmatprep.subr.bf16.mxu0 0
    %513 = vmatpush1.bf16.msra.mxu0 %v500
    %514 = vmatprep.subr.bf16.mxu0 0
    %515 = vmatpush1.bf16.msra.mxu0 %v499
    %516 = vmatprep.subr.bf16.mxu0 0
    %517 = vmatpush1.bf16.msra.mxu0 %v498
    %518 = vmatprep.subr.bf16.mxu0 0
    %519 = vmatpush1.bf16.msra.mxu0 %v497
    %520 = vmatprep.subr.bf16.mxu0 0
    %521 = vmatpush1.bf16.msra.mxu0 %v496
    %522 = vmatprep.subr.bf16.mxu0 0
    %523 = vmatpush1.bf16.msra.mxu0 %v495
    %524 = vmatprep.subr.bf16.mxu0 0
    %525 = vmatpush1.bf16.msra.mxu0 %v494
    %526 = vmatprep.subr.bf16.mxu0 0
    %527 = vmatpush2.bf16.msra.mxu0 0
    %528 = vmatprep.subr.bf16.mxu0 0
    %529 = vmatpush2.bf16.msra.mxu0 0
    %530 = vmatprep.subr.bf16.mxu0 0
    %531 = vmatpush2.bf16.msra.mxu0 0
    %532 = vmatprep.subr.bf16.mxu0 0
    %533 = vmatpush2.bf16.msra.mxu0 0
    %534 = vmatprep.subr.bf16.mxu0 0
    %535 = vmatpush2.bf16.msra.mxu0 0
    %536 = vmatprep.subr.bf16.mxu0 0
    %537 = vmatpush2.bf16.msra.mxu0 0
    %538 = vmatprep.subr.bf16.mxu0 0
    %539 = vmatpush2.bf16.msra.mxu0 0
    %540 = vmatprep.subr.bf16.mxu0 0
    %541 = vmatpush2.bf16.msra.mxu0 0
    %542 = vmatprep.mubr.bf16.mxu0 0
    %543 = vmatmul.mubr.bf16.gmra.mxu0 %v439
    %v544 = vpop.f32.mrf.mxu0
    %v545 = vadd.f32 %v461, %v544
    %v546 = vpop.f32.mrf.mxu0
    %v547 = vpop.f32.mrf.mxu0
    %v548 = vpop.f32.mrf.mxu0
    %549 = vdwg.mxu0
    %v550 = vmax.f32 %v545, 0.0
    %v551 = vpack.c.bf16 %v550, %v550
    %s552 = scalar_lea.vmem [#allocation2], 320
    %v553 = vld [vmem:[%s552] sm:$0xf]
    %v554 = vld [vmem:[%s552 + $0x4] sm:$0xf]
    %v555 = vld [vmem:[%s552 + $0x8] sm:$0xf]
    %v556 = vld [vmem:[%s552 + $0xc] sm:$0xf]
    %v557 = vld [vmem:[%s552 + $0x10] sm:$0xf]
    %v558 = vld [vmem:[%s552 + $0x14] sm:$0xf]
    %v559 = vld [vmem:[%s552 + $0x18] sm:$0xf]
    %v560 = vld [vmem:[%s552 + $0x1c] sm:$0xf]
    %v561 = vld [vmem:[%s552 + $0x20] sm:$0xf]
    %v562 = vld [vmem:[%s552 + $0x24] sm:$0xf]
    %v563 = vld [vmem:[%s552 + $0x28] sm:$0xf]
    %v564 = vld [vmem:[%s552 + $0x2c] sm:$0xf]
    %v565 = vld [vmem:[%s552 + $0x30] sm:$0xf]
    %v566 = vld [vmem:[%s552 + $0x34] sm:$0xf]
    %v567 = vld [vmem:[%s552 + $0x38] sm:$0xf]
    %v568 = vld [vmem:[%s552 + $0x3c] sm:$0xf]
    %v569 = vld [vmem:[#allocation4 + $0x5] sm:$0x1]
    %v570 = vlaneseq
    %v571 = vshrl.u32 %v570, 7
    %v572 = vsub.s32 0, %v571
    %v573 = vrot.slane %v569, %v572
    %v590 = vunpack.c.l.b16 %v553
    %v591 = vunpack.c.l.b16 %v554
    %v592 = vunpack.c.l.b16 %v555
    %v593 = vunpack.c.l.b16 %v556
    %v594 = vunpack.c.l.b16 %v557
    %v595 = vunpack.c.l.b16 %v558
    %v596 = vunpack.c.l.b16 %v559
    %v597 = vunpack.c.l.b16 %v560
    %v598 = vunpack.c.l.b16 %v561
    %v599 = vunpack.c.l.b16 %v562
    %v600 = vunpack.c.l.b16 %v563
    %v601 = vunpack.c.l.b16 %v564
    %v602 = vunpack.c.l.b16 %v565
    %v603 = vunpack.c.l.b16 %v566
    %v604 = vunpack.c.l.b16 %v567
    %v605 = vunpack.c.l.b16 %v568
    %v606 = vpack.c.b16 %v591, %v590
    %v607 = vpack.c.b16 %v593, %v592
    %v608 = vpack.c.b16 %v595, %v594
    %v609 = vpack.c.b16 %v597, %v596
    %v610 = vpack.c.b16 %v599, %v598
    %v611 = vpack.c.b16 %v601, %v600
    %v612 = vpack.c.b16 %v603, %v602
    %v613 = vpack.c.b16 %v605, %v604
    %622 = vmatprep.subr.bf16.mxu0 0
    %623 = vmatpush1.bf16.msra.mxu0 %v613
    %624 = vmatprep.subr.bf16.mxu0 0
    %625 = vmatpush1.bf16.msra.mxu0 %v612
    %626 = vmatprep.subr.bf16.mxu0 0
    %627 = vmatpush1.bf16.msra.mxu0 %v611
    %628 = vmatprep.subr.bf16.mxu0 0
    %629 = vmatpush1.bf16.msra.mxu0 %v610
    %630 = vmatprep.subr.bf16.mxu0 0
    %631 = vmatpush1.bf16.msra.mxu0 %v609
    %632 = vmatprep.subr.bf16.mxu0 0
    %633 = vmatpush1.bf16.msra.mxu0 %v608
    %634 = vmatprep.subr.bf16.mxu0 0
    %635 = vmatpush1.bf16.msra.mxu0 %v607
    %636 = vmatprep.subr.bf16.mxu0 0
    %637 = vmatpush1.bf16.msra.mxu0 %v606
    %638 = vmatprep.subr.bf16.mxu0 0
    %639 = vmatpush2.bf16.msra.mxu0 0
    %640 = vmatprep.subr.bf16.mxu0 0
    %641 = vmatpush2.bf16.msra.mxu0 0
    %642 = vmatprep.subr.bf16.mxu0 0
    %643 = vmatpush2.bf16.msra.mxu0 0
    %644 = vmatprep.subr.bf16.mxu0 0
    %645 = vmatpush2.bf16.msra.mxu0 0
    %646 = vmatprep.subr.bf16.mxu0 0
    %647 = vmatpush2.bf16.msra.mxu0 0
    %648 = vmatprep.subr.bf16.mxu0 0
    %649 = vmatpush2.bf16.msra.mxu0 0
    %650 = vmatprep.subr.bf16.mxu0 0
    %651 = vmatpush2.bf16.msra.mxu0 0
    %652 = vmatprep.subr.bf16.mxu0 0
    %653 = vmatpush2.bf16.msra.mxu0 0
    %654 = vmatprep.mubr.bf16.mxu0 0
    %655 = vmatmul.mubr.bf16.gmra.mxu0 %v551
    %v656 = vpop.f32.mrf.mxu0
    %v657 = vadd.f32 %v573, %v656
    %v658 = vpop.f32.mrf.mxu0
    %v659 = vpop.f32.mrf.mxu0
    %v660 = vpop.f32.mrf.mxu0
    %661 = vdwg.mxu0
    %v662 = vmax.f32 %v657, 0.0
    %v663 = vpack.c.bf16 %v662, %v662
    %s664 = scalar_lea.vmem [#allocation2], 384
    %v665 = vld [vmem:[%s664] sm:$0xf]
    %v666 = vld [vmem:[%s664 + $0x4] sm:$0xf]
    %v667 = vld [vmem:[%s664 + $0x8] sm:$0xf]
    %v668 = vld [vmem:[%s664 + $0xc] sm:$0xf]
    %v669 = vld [vmem:[%s664 + $0x10] sm:$0xf]
    %v670 = vld [vmem:[%s664 + $0x14] sm:$0xf]
    %v671 = vld [vmem:[%s664 + $0x18] sm:$0xf]
    %v672 = vld [vmem:[%s664 + $0x1c] sm:$0xf]
    %v673 = vld [vmem:[%s664 + $0x20] sm:$0xf]
    %v674 = vld [vmem:[%s664 + $0x24] sm:$0xf]
    %v675 = vld [vmem:[%s664 + $0x28] sm:$0xf]
    %v676 = vld [vmem:[%s664 + $0x2c] sm:$0xf]
    %v677 = vld [vmem:[%s664 + $0x30] sm:$0xf]
    %v678 = vld [vmem:[%s664 + $0x34] sm:$0xf]
    %v679 = vld [vmem:[%s664 + $0x38] sm:$0xf]
    %v680 = vld [vmem:[%s664 + $0x3c] sm:$0xf]
    %v681 = vld [vmem:[#allocation4 + $0x6] sm:$0x1]
    %v682 = vlaneseq
    %v683 = vshrl.u32 %v682, 7
    %v684 = vsub.s32 0, %v683
    %v685 = vrot.slane %v681, %v684
    %v702 = vunpack.c.l.b16 %v665
    %v703 = vunpack.c.l.b16 %v666
    %v704 = vunpack.c.l.b16 %v667
    %v705 = vunpack.c.l.b16 %v668
    %v706 = vunpack.c.l.b16 %v669
    %v707 = vunpack.c.l.b16 %v670
    %v708 = vunpack.c.l.b16 %v671
    %v709 = vunpack.c.l.b16 %v672
    %v710 = vunpack.c.l.b16 %v673
    %v711 = vunpack.c.l.b16 %v674
    %v712 = vunpack.c.l.b16 %v675
    %v713 = vunpack.c.l.b16 %v676
    %v714 = vunpack.c.l.b16 %v677
    %v715 = vunpack.c.l.b16 %v678
    %v716 = vunpack.c.l.b16 %v679
    %v717 = vunpack.c.l.b16 %v680
    %v718 = vpack.c.b16 %v703, %v702
    %v719 = vpack.c.b16 %v705, %v704
    %v720 = vpack.c.b16 %v707, %v706
    %v721 = vpack.c.b16 %v709, %v708
    %v722 = vpack.c.b16 %v711, %v710
    %v723 = vpack.c.b16 %v713, %v712
    %v724 = vpack.c.b16 %v715, %v714
    %v725 = vpack.c.b16 %v717, %v716
    %734 = vmatprep.subr.bf16.mxu0 0
    %735 = vmatpush1.bf16.msra.mxu0 %v725
    %736 = vmatprep.subr.bf16.mxu0 0
    %737 = vmatpush1.bf16.msra.mxu0 %v724
    %738 = vmatprep.subr.bf16.mxu0 0
    %739 = vmatpush1.bf16.msra.mxu0 %v723
    %740 = vmatprep.subr.bf16.mxu0 0
    %741 = vmatpush1.bf16.msra.mxu0 %v722
    %742 = vmatprep.subr.bf16.mxu0 0
    %743 = vmatpush1.bf16.msra.mxu0 %v721
    %744 = vmatprep.subr.bf16.mxu0 0
    %745 = vmatpush1.bf16.msra.mxu0 %v720
    %746 = vmatprep.subr.bf16.mxu0 0
    %747 = vmatpush1.bf16.msra.mxu0 %v719
    %748 = vmatprep.subr.bf16.mxu0 0
    %749 = vmatpush1.bf16.msra.mxu0 %v718
    %750 = vmatprep.subr.bf16.mxu0 0
    %751 = vmatpush2.bf16.msra.mxu0 0
    %752 = vmatprep.subr.bf16.mxu0 0
    %753 = vmatpush2.bf16.msra.mxu0 0
    %754 = vmatprep.subr.bf16.mxu0 0
    %755 = vmatpush2.bf16.msra.mxu0 0
    %756 = vmatprep.subr.bf16.mxu0 0
    %757 = vmatpush2.bf16.msra.mxu0 0
    %758 = vmatprep.subr.bf16.mxu0 0
    %759 = vmatpush2.bf16.msra.mxu0 0
    %760 = vmatprep.subr.bf16.mxu0 0
    %761 = vmatpush2.bf16.msra.mxu0 0
    %762 = vmatprep.subr.bf16.mxu0 0
    %763 = vmatpush2.bf16.msra.mxu0 0
    %764 = vmatprep.subr.bf16.mxu0 0
    %765 = vmatpush2.bf16.msra.mxu0 0
    %766 = vmatprep.mubr.bf16.mxu0 0
    %767 = vmatmul.mubr.bf16.gmra.mxu0 %v663
    %v768 = vpop.f32.mrf.mxu0
    %v769 = vadd.f32 %v685, %v768
    %v770 = vpop.f32.mrf.mxu0
    %v771 = vpop.f32.mrf.mxu0
    %v772 = vpop.f32.mrf.mxu0
    %773 = vdwg.mxu0
    %v774 = vmax.f32 %v769, 0.0
    %v775 = vpack.c.bf16 %v774, %v774
    %s776 = scalar_lea.vmem [#allocation2], 448
    %v777 = vld [vmem:[%s776] sm:$0xf]
    %v778 = vld [vmem:[%s776 + $0x4] sm:$0xf]
    %v779 = vld [vmem:[%s776 + $0x8] sm:$0xf]
    %v780 = vld [vmem:[%s776 + $0xc] sm:$0xf]
    %v781 = vld [vmem:[%s776 + $0x10] sm:$0xf]
    %v782 = vld [vmem:[%s776 + $0x14] sm:$0xf]
    %v783 = vld [vmem:[%s776 + $0x18] sm:$0xf]
    %v784 = vld [vmem:[%s776 + $0x1c] sm:$0xf]
    %v785 = vld [vmem:[%s776 + $0x20] sm:$0xf]
    %v786 = vld [vmem:[%s776 + $0x24] sm:$0xf]
    %v787 = vld [vmem:[%s776 + $0x28] sm:$0xf]
    %v788 = vld [vmem:[%s776 + $0x2c] sm:$0xf]
    %v789 = vld [vmem:[%s776 + $0x30] sm:$0xf]
    %v790 = vld [vmem:[%s776 + $0x34] sm:$0xf]
    %v791 = vld [vmem:[%s776 + $0x38] sm:$0xf]
    %v792 = vld [vmem:[%s776 + $0x3c] sm:$0xf]
    %v793 = vld [vmem:[#allocation4 + $0x7] sm:$0x1]
    %v794 = vlaneseq
    %v795 = vshrl.u32 %v794, 7
    %v796 = vsub.s32 0, %v795
    %v797 = vrot.slane %v793, %v796
    %v814 = vunpack.c.l.b16 %v777
    %v815 = vunpack.c.l.b16 %v778
    %v816 = vunpack.c.l.b16 %v779
    %v817 = vunpack.c.l.b16 %v780
    %v818 = vunpack.c.l.b16 %v781
    %v819 = vunpack.c.l.b16 %v782
    %v820 = vunpack.c.l.b16 %v783
    %v821 = vunpack.c.l.b16 %v784
    %v822 = vunpack.c.l.b16 %v785
    %v823 = vunpack.c.l.b16 %v786
    %v824 = vunpack.c.l.b16 %v787
    %v825 = vunpack.c.l.b16 %v788
    %v826 = vunpack.c.l.b16 %v789
    %v827 = vunpack.c.l.b16 %v790
    %v828 = vunpack.c.l.b16 %v791
    %v829 = vunpack.c.l.b16 %v792
    %v830 = vpack.c.b16 %v815, %v814
    %v831 = vpack.c.b16 %v817, %v816
    %v832 = vpack.c.b16 %v819, %v818
    %v833 = vpack.c.b16 %v821, %v820
    %v834 = vpack.c.b16 %v823, %v822
    %v835 = vpack.c.b16 %v825, %v824
    %v836 = vpack.c.b16 %v827, %v826
    %v837 = vpack.c.b16 %v829, %v828
    %846 = vmatprep.subr.bf16.mxu0 0
    %847 = vmatpush1.bf16.msra.mxu0 %v837
    %848 = vmatprep.subr.bf16.mxu0 0
    %849 = vmatpush1.bf16.msra.mxu0 %v836
    %850 = vmatprep.subr.bf16.mxu0 0
    %851 = vmatpush1.bf16.msra.mxu0 %v835
    %852 = vmatprep.subr.bf16.mxu0 0
    %853 = vmatpush1.bf16.msra.mxu0 %v834
    %854 = vmatprep.subr.bf16.mxu0 0
    %855 = vmatpush1.bf16.msra.mxu0 %v833
    %856 = vmatprep.subr.bf16.mxu0 0
    %857 = vmatpush1.bf16.msra.mxu0 %v832
    %858 = vmatprep.subr.bf16.mxu0 0
    %859 = vmatpush1.bf16.msra.mxu0 %v831
    %860 = vmatprep.subr.bf16.mxu0 0
    %861 = vmatpush1.bf16.msra.mxu0 %v830
    %862 = vmatprep.subr.bf16.mxu0 0
    %863 = vmatpush2.bf16.msra.mxu0 0
    %864 = vmatprep.subr.bf16.mxu0 0
    %865 = vmatpush2.bf16.msra.mxu0 0
    %866 = vmatprep.subr.bf16.mxu0 0
    %867 = vmatpush2.bf16.msra.mxu0 0
    %868 = vmatprep.subr.bf16.mxu0 0
    %869 = vmatpush2.bf16.msra.mxu0 0
    %870 = vmatprep.subr.bf16.mxu0 0
    %871 = vmatpush2.bf16.msra.mxu0 0
    %872 = vmatprep.subr.bf16.mxu0 0
    %873 = vmatpush2.bf16.msra.mxu0 0
    %874 = vmatprep.subr.bf16.mxu0 0
    %875 = vmatpush2.bf16.msra.mxu0 0
    %876 = vmatprep.subr.bf16.mxu0 0
    %877 = vmatpush2.bf16.msra.mxu0 0
    %878 = vmatprep.mubr.bf16.mxu0 0
    %879 = vmatmul.mubr.bf16.gmra.mxu0 %v775
    %v880 = vpop.f32.mrf.mxu0
    %v881 = vadd.f32 %v797, %v880
    %v882 = vpop.f32.mrf.mxu0
    %v883 = vpop.f32.mrf.mxu0
    %v884 = vpop.f32.mrf.mxu0
    %885 = vdwg.mxu0
    %v886 = vmax.f32 %v881, 0.0
    %v887 = vpack.c.bf16 %v886, %v886
    %s888 = scalar_lea.vmem [#allocation2], 512
    %v889 = vld [vmem:[%s888] sm:$0xf]
    %v890 = vld [vmem:[%s888 + $0x4] sm:$0xf]
    %v891 = vld [vmem:[%s888 + $0x8] sm:$0xf]
    %v892 = vld [vmem:[%s888 + $0xc] sm:$0xf]
    %v893 = vld [vmem:[%s888 + $0x10] sm:$0xf]
    %v894 = vld [vmem:[%s888 + $0x14] sm:$0xf]
    %v895 = vld [vmem:[%s888 + $0x18] sm:$0xf]
    %v896 = vld [vmem:[%s888 + $0x1c] sm:$0xf]
    %v897 = vld [vmem:[%s888 + $0x20] sm:$0xf]
    %v898 = vld [vmem:[%s888 + $0x24] sm:$0xf]
    %v899 = vld [vmem:[%s888 + $0x28] sm:$0xf]
    %v900 = vld [vmem:[%s888 + $0x2c] sm:$0xf]
    %v901 = vld [vmem:[%s888 + $0x30] sm:$0xf]
    %v902 = vld [vmem:[%s888 + $0x34] sm:$0xf]
    %v903 = vld [vmem:[%s888 + $0x38] sm:$0xf]
    %v904 = vld [vmem:[%s888 + $0x3c] sm:$0xf]
    %v905 = vld [vmem:[#allocation4 + $0x8] sm:$0x1]
    %v906 = vlaneseq
    %v907 = vshrl.u32 %v906, 7
    %v908 = vsub.s32 0, %v907
    %v909 = vrot.slane %v905, %v908
    %v926 = vunpack.c.l.b16 %v889
    %v927 = vunpack.c.l.b16 %v890
    %v928 = vunpack.c.l.b16 %v891
    %v929 = vunpack.c.l.b16 %v892
    %v930 = vunpack.c.l.b16 %v893
    %v931 = vunpack.c.l.b16 %v894
    %v932 = vunpack.c.l.b16 %v895
    %v933 = vunpack.c.l.b16 %v896
    %v934 = vunpack.c.l.b16 %v897
    %v935 = vunpack.c.l.b16 %v898
    %v936 = vunpack.c.l.b16 %v899
    %v937 = vunpack.c.l.b16 %v900
    %v938 = vunpack.c.l.b16 %v901
    %v939 = vunpack.c.l.b16 %v902
    %v940 = vunpack.c.l.b16 %v903
    %v941 = vunpack.c.l.b16 %v904
    %v942 = vpack.c.b16 %v927, %v926
    %v943 = vpack.c.b16 %v929, %v928
    %v944 = vpack.c.b16 %v931, %v930
    %v945 = vpack.c.b16 %v933, %v932
    %v946 = vpack.c.b16 %v935, %v934
    %v947 = vpack.c.b16 %v937, %v936
    %v948 = vpack.c.b16 %v939, %v938
    %v949 = vpack.c.b16 %v941, %v940
    %958 = vmatprep.subr.bf16.mxu0 0
    %959 = vmatpush1.bf16.msra.mxu0 %v949
    %960 = vmatprep.subr.bf16.mxu0 0
    %961 = vmatpush1.bf16.msra.mxu0 %v948
    %962 = vmatprep.subr.bf16.mxu0 0
    %963 = vmatpush1.bf16.msra.mxu0 %v947
    %964 = vmatprep.subr.bf16.mxu0 0
    %965 = vmatpush1.bf16.msra.mxu0 %v946
    %966 = vmatprep.subr.bf16.mxu0 0
    %967 = vmatpush1.bf16.msra.mxu0 %v945
    %968 = vmatprep.subr.bf16.mxu0 0
    %969 = vmatpush1.bf16.msra.mxu0 %v944
    %970 = vmatprep.subr.bf16.mxu0 0
    %971 = vmatpush1.bf16.msra.mxu0 %v943
    %972 = vmatprep.subr.bf16.mxu0 0
    %973 = vmatpush1.bf16.msra.mxu0 %v942
    %974 = vmatprep.subr.bf16.mxu0 0
    %975 = vmatpush2.bf16.msra.mxu0 0
    %976 = vmatprep.subr.bf16.mxu0 0
    %977 = vmatpush2.bf16.msra.mxu0 0
    %978 = vmatprep.subr.bf16.mxu0 0
    %979 = vmatpush2.bf16.msra.mxu0 0
    %980 = vmatprep.subr.bf16.mxu0 0
    %981 = vmatpush2.bf16.msra.mxu0 0
    %982 = vmatprep.subr.bf16.mxu0 0
    %983 = vmatpush2.bf16.msra.mxu0 0
    %984 = vmatprep.subr.bf16.mxu0 0
    %985 = vmatpush2.bf16.msra.mxu0 0
    %986 = vmatprep.subr.bf16.mxu0 0
    %987 = vmatpush2.bf16.msra.mxu0 0
    %988 = vmatprep.subr.bf16.mxu0 0
    %989 = vmatpush2.bf16.msra.mxu0 0
    %990 = vmatprep.mubr.bf16.mxu0 0
    %991 = vmatmul.mubr.bf16.gmra.mxu0 %v887
    %v992 = vpop.f32.mrf.mxu0
    %v993 = vadd.f32 %v909, %v992
    %v994 = vpop.f32.mrf.mxu0
    %v995 = vpop.f32.mrf.mxu0
    %v996 = vpop.f32.mrf.mxu0
    %997 = vdwg.mxu0
    %v998 = vmax.f32 %v993, 0.0
    %v999 = vpack.c.bf16 %v998, %v998
    %s1000 = scalar_lea.vmem [#allocation2], 576
    %v1001 = vld [vmem:[%s1000] sm:$0xf]
    %v1002 = vld [vmem:[%s1000 + $0x4] sm:$0xf]
    %v1003 = vld [vmem:[%s1000 + $0x8] sm:$0xf]
    %v1004 = vld [vmem:[%s1000 + $0xc] sm:$0xf]
    %v1005 = vld [vmem:[%s1000 + $0x10] sm:$0xf]
    %v1006 = vld [vmem:[%s1000 + $0x14] sm:$0xf]
    %v1007 = vld [vmem:[%s1000 + $0x18] sm:$0xf]
    %v1008 = vld [vmem:[%s1000 + $0x1c] sm:$0xf]
    %v1009 = vld [vmem:[%s1000 + $0x20] sm:$0xf]
    %v1010 = vld [vmem:[%s1000 + $0x24] sm:$0xf]
    %v1011 = vld [vmem:[%s1000 + $0x28] sm:$0xf]
    %v1012 = vld [vmem:[%s1000 + $0x2c] sm:$0xf]
    %v1013 = vld [vmem:[%s1000 + $0x30] sm:$0xf]
    %v1014 = vld [vmem:[%s1000 + $0x34] sm:$0xf]
    %v1015 = vld [vmem:[%s1000 + $0x38] sm:$0xf]
    %v1016 = vld [vmem:[%s1000 + $0x3c] sm:$0xf]
    %v1017 = vld [vmem:[#allocation4 + $0x9] sm:$0x1]
    %v1018 = vlaneseq
    %v1019 = vshrl.u32 %v1018, 7
    %v1020 = vsub.s32 0, %v1019
    %v1021 = vrot.slane %v1017, %v1020
    %v1038 = vunpack.c.l.b16 %v1001
    %v1039 = vunpack.c.l.b16 %v1002
    %v1040 = vunpack.c.l.b16 %v1003
    %v1041 = vunpack.c.l.b16 %v1004
    %v1042 = vunpack.c.l.b16 %v1005
    %v1043 = vunpack.c.l.b16 %v1006
    %v1044 = vunpack.c.l.b16 %v1007
    %v1045 = vunpack.c.l.b16 %v1008
    %v1046 = vunpack.c.l.b16 %v1009
    %v1047 = vunpack.c.l.b16 %v1010
    %v1048 = vunpack.c.l.b16 %v1011
    %v1049 = vunpack.c.l.b16 %v1012
    %v1050 = vunpack.c.l.b16 %v1013
    %v1051 = vunpack.c.l.b16 %v1014
    %v1052 = vunpack.c.l.b16 %v1015
    %v1053 = vunpack.c.l.b16 %v1016
    %v1054 = vpack.c.b16 %v1039, %v1038
    %v1055 = vpack.c.b16 %v1041, %v1040
    %v1056 = vpack.c.b16 %v1043, %v1042
    %v1057 = vpack.c.b16 %v1045, %v1044
    %v1058 = vpack.c.b16 %v1047, %v1046
    %v1059 = vpack.c.b16 %v1049, %v1048
    %v1060 = vpack.c.b16 %v1051, %v1050
    %v1061 = vpack.c.b16 %v1053, %v1052
    %1070 = vmatprep.subr.bf16.mxu0 0
    %1071 = vmatpush1.bf16.msra.mxu0 %v1061
    %1072 = vmatprep.subr.bf16.mxu0 0
    %1073 = vmatpush1.bf16.msra.mxu0 %v1060
    %1074 = vmatprep.subr.bf16.mxu0 0
    %1075 = vmatpush1.bf16.msra.mxu0 %v1059
    %1076 = vmatprep.subr.bf16.mxu0 0
    %1077 = vmatpush1.bf16.msra.mxu0 %v1058
    %1078 = vmatprep.subr.bf16.mxu0 0
    %1079 = vmatpush1.bf16.msra.mxu0 %v1057
    %1080 = vmatprep.subr.bf16.mxu0 0
    %1081 = vmatpush1.bf16.msra.mxu0 %v1056
    %1082 = vmatprep.subr.bf16.mxu0 0
    %1083 = vmatpush1.bf16.msra.mxu0 %v1055
    %1084 = vmatprep.subr.bf16.mxu0 0
    %1085 = vmatpush1.bf16.msra.mxu0 %v1054
    %1086 = vmatprep.subr.bf16.mxu0 0
    %1087 = vmatpush2.bf16.msra.mxu0 0
    %1088 = vmatprep.subr.bf16.mxu0 0
    %1089 = vmatpush2.bf16.msra.mxu0 0
    %1090 = vmatprep.subr.bf16.mxu0 0
    %1091 = vmatpush2.bf16.msra.mxu0 0
    %1092 = vmatprep.subr.bf16.mxu0 0
    %1093 = vmatpush2.bf16.msra.mxu0 0
    %1094 = vmatprep.subr.bf16.mxu0 0
    %1095 = vmatpush2.bf16.msra.mxu0 0
    %1096 = vmatprep.subr.bf16.mxu0 0
    %1097 = vmatpush2.bf16.msra.mxu0 0
    %1098 = vmatprep.subr.bf16.mxu0 0
    %1099 = vmatpush2.bf16.msra.mxu0 0
    %1100 = vmatprep.subr.bf16.mxu0 0
    %1101 = vmatpush2.bf16.msra.mxu0 0
    %1102 = vmatprep.mubr.bf16.mxu0 0
    %1103 = vmatmul.mubr.bf16.gmra.mxu0 %v999
    %v1104 = vpop.f32.mrf.mxu0
    %v1105 = vadd.f32 %v1021, %v1104
    %v1106 = vpop.f32.mrf.mxu0
    %v1107 = vpop.f32.mrf.mxu0
    %v1108 = vpop.f32.mrf.mxu0
    %1109 = vdwg.mxu0
    %v1110 = vmax.f32 %v1105, 0.0
    %v1111 = vpack.c.bf16 %v1110, %v1110
    %s1112 = scalar_lea.vmem [#allocation2], 640
    %v1113 = vld [vmem:[%s1112] sm:$0xf]
    %v1114 = vld [vmem:[%s1112 + $0x4] sm:$0xf]
    %v1115 = vld [vmem:[%s1112 + $0x8] sm:$0xf]
    %v1116 = vld [vmem:[%s1112 + $0xc] sm:$0xf]
    %v1117 = vld [vmem:[%s1112 + $0x10] sm:$0xf]
    %v1118 = vld [vmem:[%s1112 + $0x14] sm:$0xf]
    %v1119 = vld [vmem:[%s1112 + $0x18] sm:$0xf]
    %v1120 = vld [vmem:[%s1112 + $0x1c] sm:$0xf]
    %v1121 = vld [vmem:[%s1112 + $0x20] sm:$0xf]
    %v1122 = vld [vmem:[%s1112 + $0x24] sm:$0xf]
    %v1123 = vld [vmem:[%s1112 + $0x28] sm:$0xf]
    %v1124 = vld [vmem:[%s1112 + $0x2c] sm:$0xf]
    %v1125 = vld [vmem:[%s1112 + $0x30] sm:$0xf]
    %v1126 = vld [vmem:[%s1112 + $0x34] sm:$0xf]
    %v1127 = vld [vmem:[%s1112 + $0x38] sm:$0xf]
    %v1128 = vld [vmem:[%s1112 + $0x3c] sm:$0xf]
    %v1129 = vld [vmem:[#allocation4 + $0xa] sm:$0x1]
    %v1130 = vlaneseq
    %v1131 = vshrl.u32 %v1130, 7
    %v1132 = vsub.s32 0, %v1131
    %v1133 = vrot.slane %v1129, %v1132
    %v1150 = vunpack.c.l.b16 %v1113
    %v1151 = vunpack.c.l.b16 %v1114
    %v1152 = vunpack.c.l.b16 %v1115
    %v1153 = vunpack.c.l.b16 %v1116
    %v1154 = vunpack.c.l.b16 %v1117
    %v1155 = vunpack.c.l.b16 %v1118
    %v1156 = vunpack.c.l.b16 %v1119
    %v1157 = vunpack.c.l.b16 %v1120
    %v1158 = vunpack.c.l.b16 %v1121
    %v1159 = vunpack.c.l.b16 %v1122
    %v1160 = vunpack.c.l.b16 %v1123
    %v1161 = vunpack.c.l.b16 %v1124
    %v1162 = vunpack.c.l.b16 %v1125
    %v1163 = vunpack.c.l.b16 %v1126
    %v1164 = vunpack.c.l.b16 %v1127
    %v1165 = vunpack.c.l.b16 %v1128
    %v1166 = vpack.c.b16 %v1151, %v1150
    %v1167 = vpack.c.b16 %v1153, %v1152
    %v1168 = vpack.c.b16 %v1155, %v1154
    %v1169 = vpack.c.b16 %v1157, %v1156
    %v1170 = vpack.c.b16 %v1159, %v1158
    %v1171 = vpack.c.b16 %v1161, %v1160
    %v1172 = vpack.c.b16 %v1163, %v1162
    %v1173 = vpack.c.b16 %v1165, %v1164
    %1182 = vmatprep.subr.bf16.mxu0 0
    %1183 = vmatpush1.bf16.msra.mxu0 %v1173
    %1184 = vmatprep.subr.bf16.mxu0 0
    %1185 = vmatpush1.bf16.msra.mxu0 %v1172
    %1186 = vmatprep.subr.bf16.mxu0 0
    %1187 = vmatpush1.bf16.msra.mxu0 %v1171
    %1188 = vmatprep.subr.bf16.mxu0 0
    %1189 = vmatpush1.bf16.msra.mxu0 %v1170
    %1190 = vmatprep.subr.bf16.mxu0 0
    %1191 = vmatpush1.bf16.msra.mxu0 %v1169
    %1192 = vmatprep.subr.bf16.mxu0 0
    %1193 = vmatpush1.bf16.msra.mxu0 %v1168
    %1194 = vmatprep.subr.bf16.mxu0 0
    %1195 = vmatpush1.bf16.msra.mxu0 %v1167
    %1196 = vmatprep.subr.bf16.mxu0 0
    %1197 = vmatpush1.bf16.msra.mxu0 %v1166
    %1198 = vmatprep.subr.bf16.mxu0 0
    %1199 = vmatpush2.bf16.msra.mxu0 0
    %1200 = vmatprep.subr.bf16.mxu0 0
    %1201 = vmatpush2.bf16.msra.mxu0 0
    %1202 = vmatprep.subr.bf16.mxu0 0
    %1203 = vmatpush2.bf16.msra.mxu0 0
    %1204 = vmatprep.subr.bf16.mxu0 0
    %1205 = vmatpush2.bf16.msra.mxu0 0
    %1206 = vmatprep.subr.bf16.mxu0 0
    %1207 = vmatpush2.bf16.msra.mxu0 0
    %1208 = vmatprep.subr.bf16.mxu0 0
    %1209 = vmatpush2.bf16.msra.mxu0 0
    %1210 = vmatprep.subr.bf16.mxu0 0
    %1211 = vmatpush2.bf16.msra.mxu0 0
    %1212 = vmatprep.subr.bf16.mxu0 0
    %1213 = vmatpush2.bf16.msra.mxu0 0
    %1214 = vmatprep.mubr.bf16.mxu0 0
    %1215 = vmatmul.mubr.bf16.gmra.mxu0 %v1111
    %v1216 = vpop.f32.mrf.mxu0
    %v1217 = vadd.f32 %v1133, %v1216
    %v1218 = vpop.f32.mrf.mxu0
    %v1219 = vpop.f32.mrf.mxu0
    %v1220 = vpop.f32.mrf.mxu0
    %1221 = vdwg.mxu0
    %v1222 = vmax.f32 %v1217, 0.0
    %v1223 = vpack.c.bf16 %v1222, %v1222
    %s1224 = scalar_lea.vmem [#allocation2], 704
    %v1225 = vld [vmem:[%s1224] sm:$0xf]
    %v1226 = vld [vmem:[%s1224 + $0x4] sm:$0xf]
    %v1227 = vld [vmem:[%s1224 + $0x8] sm:$0xf]
    %v1228 = vld [vmem:[%s1224 + $0xc] sm:$0xf]
    %v1229 = vld [vmem:[%s1224 + $0x10] sm:$0xf]
    %v1230 = vld [vmem:[%s1224 + $0x14] sm:$0xf]
    %v1231 = vld [vmem:[%s1224 + $0x18] sm:$0xf]
    %v1232 = vld [vmem:[%s1224 + $0x1c] sm:$0xf]
    %v1233 = vld [vmem:[%s1224 + $0x20] sm:$0xf]
    %v1234 = vld [vmem:[%s1224 + $0x24] sm:$0xf]
    %v1235 = vld [vmem:[%s1224 + $0x28] sm:$0xf]
    %v1236 = vld [vmem:[%s1224 + $0x2c] sm:$0xf]
    %v1237 = vld [vmem:[%s1224 + $0x30] sm:$0xf]
    %v1238 = vld [vmem:[%s1224 + $0x34] sm:$0xf]
    %v1239 = vld [vmem:[%s1224 + $0x38] sm:$0xf]
    %v1240 = vld [vmem:[%s1224 + $0x3c] sm:$0xf]
    %v1241 = vld [vmem:[#allocation4 + $0xb] sm:$0x1]
    %v1242 = vlaneseq
    %v1243 = vshrl.u32 %v1242, 7
    %v1244 = vsub.s32 0, %v1243
    %v1245 = vrot.slane %v1241, %v1244
    %v1262 = vunpack.c.l.b16 %v1225
    %v1263 = vunpack.c.l.b16 %v1226
    %v1264 = vunpack.c.l.b16 %v1227
    %v1265 = vunpack.c.l.b16 %v1228
    %v1266 = vunpack.c.l.b16 %v1229
    %v1267 = vunpack.c.l.b16 %v1230
    %v1268 = vunpack.c.l.b16 %v1231
    %v1269 = vunpack.c.l.b16 %v1232
    %v1270 = vunpack.c.l.b16 %v1233
    %v1271 = vunpack.c.l.b16 %v1234
    %v1272 = vunpack.c.l.b16 %v1235
    %v1273 = vunpack.c.l.b16 %v1236
    %v1274 = vunpack.c.l.b16 %v1237
    %v1275 = vunpack.c.l.b16 %v1238
    %v1276 = vunpack.c.l.b16 %v1239
    %v1277 = vunpack.c.l.b16 %v1240
    %v1278 = vpack.c.b16 %v1263, %v1262
    %v1279 = vpack.c.b16 %v1265, %v1264
    %v1280 = vpack.c.b16 %v1267, %v1266
    %v1281 = vpack.c.b16 %v1269, %v1268
    %v1282 = vpack.c.b16 %v1271, %v1270
    %v1283 = vpack.c.b16 %v1273, %v1272
    %v1284 = vpack.c.b16 %v1275, %v1274
    %v1285 = vpack.c.b16 %v1277, %v1276
    %1294 = vmatprep.subr.bf16.mxu0 0
    %1295 = vmatpush1.bf16.msra.mxu0 %v1285
    %1296 = vmatprep.subr.bf16.mxu0 0
    %1297 = vmatpush1.bf16.msra.mxu0 %v1284
    %1298 = vmatprep.subr.bf16.mxu0 0
    %1299 = vmatpush1.bf16.msra.mxu0 %v1283
    %1300 = vmatprep.subr.bf16.mxu0 0
    %1301 = vmatpush1.bf16.msra.mxu0 %v1282
    %1302 = vmatprep.subr.bf16.mxu0 0
    %1303 = vmatpush1.bf16.msra.mxu0 %v1281
    %1304 = vmatprep.subr.bf16.mxu0 0
    %1305 = vmatpush1.bf16.msra.mxu0 %v1280
    %1306 = vmatprep.subr.bf16.mxu0 0
    %1307 = vmatpush1.bf16.msra.mxu0 %v1279
    %1308 = vmatprep.subr.bf16.mxu0 0
    %1309 = vmatpush1.bf16.msra.mxu0 %v1278
    %1310 = vmatprep.subr.bf16.mxu0 0
    %1311 = vmatpush2.bf16.msra.mxu0 0
    %1312 = vmatprep.subr.bf16.mxu0 0
    %1313 = vmatpush2.bf16.msra.mxu0 0
    %1314 = vmatprep.subr.bf16.mxu0 0
    %1315 = vmatpush2.bf16.msra.mxu0 0
    %1316 = vmatprep.subr.bf16.mxu0 0
    %1317 = vmatpush2.bf16.msra.mxu0 0
    %1318 = vmatprep.subr.bf16.mxu0 0
    %1319 = vmatpush2.bf16.msra.mxu0 0
    %1320 = vmatprep.subr.bf16.mxu0 0
    %1321 = vmatpush2.bf16.msra.mxu0 0
    %1322 = vmatprep.subr.bf16.mxu0 0
    %1323 = vmatpush2.bf16.msra.mxu0 0
    %1324 = vmatprep.subr.bf16.mxu0 0
    %1325 = vmatpush2.bf16.msra.mxu0 0
    %1326 = vmatprep.mubr.bf16.mxu0 0
    %1327 = vmatmul.mubr.bf16.gmra.mxu0 %v1223
    %v1328 = vpop.f32.mrf.mxu0
    %v1329 = vadd.f32 %v1245, %v1328
    %v1330 = vpop.f32.mrf.mxu0
    %v1331 = vpop.f32.mrf.mxu0
    %v1332 = vpop.f32.mrf.mxu0
    %1333 = vdwg.mxu0
    %v1334 = vmax.f32 %v1329, 0.0
    %v1335 = vpack.c.bf16 %v1334, %v1334
    %s1336 = scalar_lea.vmem [#allocation2], 768
    %v1337 = vld [vmem:[%s1336] sm:$0xf]
    %v1338 = vld [vmem:[%s1336 + $0x4] sm:$0xf]
    %v1339 = vld [vmem:[%s1336 + $0x8] sm:$0xf]
    %v1340 = vld [vmem:[%s1336 + $0xc] sm:$0xf]
    %v1341 = vld [vmem:[%s1336 + $0x10] sm:$0xf]
    %v1342 = vld [vmem:[%s1336 + $0x14] sm:$0xf]
    %v1343 = vld [vmem:[%s1336 + $0x18] sm:$0xf]
    %v1344 = vld [vmem:[%s1336 + $0x1c] sm:$0xf]
    %v1345 = vld [vmem:[%s1336 + $0x20] sm:$0xf]
    %v1346 = vld [vmem:[%s1336 + $0x24] sm:$0xf]
    %v1347 = vld [vmem:[%s1336 + $0x28] sm:$0xf]
    %v1348 = vld [vmem:[%s1336 + $0x2c] sm:$0xf]
    %v1349 = vld [vmem:[%s1336 + $0x30] sm:$0xf]
    %v1350 = vld [vmem:[%s1336 + $0x34] sm:$0xf]
    %v1351 = vld [vmem:[%s1336 + $0x38] sm:$0xf]
    %v1352 = vld [vmem:[%s1336 + $0x3c] sm:$0xf]
    %v1353 = vld [vmem:[#allocation4 + $0xc] sm:$0x1]
    %v1354 = vlaneseq
    %v1355 = vshrl.u32 %v1354, 7
    %v1356 = vsub.s32 0, %v1355
    %v1357 = vrot.slane %v1353, %v1356
    %v1374 = vunpack.c.l.b16 %v1337
    %v1375 = vunpack.c.l.b16 %v1338
    %v1376 = vunpack.c.l.b16 %v1339
    %v1377 = vunpack.c.l.b16 %v1340
    %v1378 = vunpack.c.l.b16 %v1341
    %v1379 = vunpack.c.l.b16 %v1342
    %v1380 = vunpack.c.l.b16 %v1343
    %v1381 = vunpack.c.l.b16 %v1344
    %v1382 = vunpack.c.l.b16 %v1345
    %v1383 = vunpack.c.l.b16 %v1346
    %v1384 = vunpack.c.l.b16 %v1347
    %v1385 = vunpack.c.l.b16 %v1348
    %v1386 = vunpack.c.l.b16 %v1349
    %v1387 = vunpack.c.l.b16 %v1350
    %v1388 = vunpack.c.l.b16 %v1351
    %v1389 = vunpack.c.l.b16 %v1352
    %v1390 = vpack.c.b16 %v1375, %v1374
    %v1391 = vpack.c.b16 %v1377, %v1376
    %v1392 = vpack.c.b16 %v1379, %v1378
    %v1393 = vpack.c.b16 %v1381, %v1380
    %v1394 = vpack.c.b16 %v1383, %v1382
    %v1395 = vpack.c.b16 %v1385, %v1384
    %v1396 = vpack.c.b16 %v1387, %v1386
    %v1397 = vpack.c.b16 %v1389, %v1388
    %1406 = vmatprep.subr.bf16.mxu0 0
    %1407 = vmatpush1.bf16.msra.mxu0 %v1397
    %1408 = vmatprep.subr.bf16.mxu0 0
    %1409 = vmatpush1.bf16.msra.mxu0 %v1396
    %1410 = vmatprep.subr.bf16.mxu0 0
    %1411 = vmatpush1.bf16.msra.mxu0 %v1395
    %1412 = vmatprep.subr.bf16.mxu0 0
    %1413 = vmatpush1.bf16.msra.mxu0 %v1394
    %1414 = vmatprep.subr.bf16.mxu0 0
    %1415 = vmatpush1.bf16.msra.mxu0 %v1393
    %1416 = vmatprep.subr.bf16.mxu0 0
    %1417 = vmatpush1.bf16.msra.mxu0 %v1392
    %1418 = vmatprep.subr.bf16.mxu0 0
    %1419 = vmatpush1.bf16.msra.mxu0 %v1391
    %1420 = vmatprep.subr.bf16.mxu0 0
    %1421 = vmatpush1.bf16.msra.mxu0 %v1390
    %1422 = vmatprep.subr.bf16.mxu0 0
    %1423 = vmatpush2.bf16.msra.mxu0 0
    %1424 = vmatprep.subr.bf16.mxu0 0
    %1425 = vmatpush2.bf16.msra.mxu0 0
    %1426 = vmatprep.subr.bf16.mxu0 0
    %1427 = vmatpush2.bf16.msra.mxu0 0
    %1428 = vmatprep.subr.bf16.mxu0 0
    %1429 = vmatpush2.bf16.msra.mxu0 0
    %1430 = vmatprep.subr.bf16.mxu0 0
    %1431 = vmatpush2.bf16.msra.mxu0 0
    %1432 = vmatprep.subr.bf16.mxu0 0
    %1433 = vmatpush2.bf16.msra.mxu0 0
    %1434 = vmatprep.subr.bf16.mxu0 0
    %1435 = vmatpush2.bf16.msra.mxu0 0
    %1436 = vmatprep.subr.bf16.mxu0 0
    %1437 = vmatpush2.bf16.msra.mxu0 0
    %1438 = vmatprep.mubr.bf16.mxu0 0
    %1439 = vmatmul.mubr.bf16.gmra.mxu0 %v1335
    %v1440 = vpop.f32.mrf.mxu0
    %v1441 = vadd.f32 %v1357, %v1440
    %v1442 = vpop.f32.mrf.mxu0
    %v1443 = vpop.f32.mrf.mxu0
    %v1444 = vpop.f32.mrf.mxu0
    %1445 = vdwg.mxu0
    %v1446 = vmax.f32 %v1441, 0.0
    %v1447 = vpack.c.bf16 %v1446, %v1446
    %s1448 = scalar_lea.vmem [#allocation2], 832
    %v1449 = vld [vmem:[%s1448] sm:$0xf]
    %v1450 = vld [vmem:[%s1448 + $0x4] sm:$0xf]
    %v1451 = vld [vmem:[%s1448 + $0x8] sm:$0xf]
    %v1452 = vld [vmem:[%s1448 + $0xc] sm:$0xf]
    %v1453 = vld [vmem:[%s1448 + $0x10] sm:$0xf]
    %v1454 = vld [vmem:[%s1448 + $0x14] sm:$0xf]
    %v1455 = vld [vmem:[%s1448 + $0x18] sm:$0xf]
    %v1456 = vld [vmem:[%s1448 + $0x1c] sm:$0xf]
    %v1457 = vld [vmem:[%s1448 + $0x20] sm:$0xf]
    %v1458 = vld [vmem:[%s1448 + $0x24] sm:$0xf]
    %v1459 = vld [vmem:[%s1448 + $0x28] sm:$0xf]
    %v1460 = vld [vmem:[%s1448 + $0x2c] sm:$0xf]
    %v1461 = vld [vmem:[%s1448 + $0x30] sm:$0xf]
    %v1462 = vld [vmem:[%s1448 + $0x34] sm:$0xf]
    %v1463 = vld [vmem:[%s1448 + $0x38] sm:$0xf]
    %v1464 = vld [vmem:[%s1448 + $0x3c] sm:$0xf]
    %v1465 = vld [vmem:[#allocation4 + $0xd] sm:$0x1]
    %v1466 = vlaneseq
    %v1467 = vshrl.u32 %v1466, 7
    %v1468 = vsub.s32 0, %v1467
    %v1469 = vrot.slane %v1465, %v1468
    %v1486 = vunpack.c.l.b16 %v1449
    %v1487 = vunpack.c.l.b16 %v1450
    %v1488 = vunpack.c.l.b16 %v1451
    %v1489 = vunpack.c.l.b16 %v1452
    %v1490 = vunpack.c.l.b16 %v1453
    %v1491 = vunpack.c.l.b16 %v1454
    %v1492 = vunpack.c.l.b16 %v1455
    %v1493 = vunpack.c.l.b16 %v1456
    %v1494 = vunpack.c.l.b16 %v1457
    %v1495 = vunpack.c.l.b16 %v1458
    %v1496 = vunpack.c.l.b16 %v1459
    %v1497 = vunpack.c.l.b16 %v1460
    %v1498 = vunpack.c.l.b16 %v1461
    %v1499 = vunpack.c.l.b16 %v1462
    %v1500 = vunpack.c.l.b16 %v1463
    %v1501 = vunpack.c.l.b16 %v1464
    %v1502 = vpack.c.b16 %v1487, %v1486
    %v1503 = vpack.c.b16 %v1489, %v1488
    %v1504 = vpack.c.b16 %v1491, %v1490
    %v1505 = vpack.c.b16 %v1493, %v1492
    %v1506 = vpack.c.b16 %v1495, %v1494
    %v1507 = vpack.c.b16 %v1497, %v1496
    %v1508 = vpack.c.b16 %v1499, %v1498
    %v1509 = vpack.c.b16 %v1501, %v1500
    %1518 = vmatprep.subr.bf16.mxu0 0
    %1519 = vmatpush1.bf16.msra.mxu0 %v1509
    %1520 = vmatprep.subr.bf16.mxu0 0
    %1521 = vmatpush1.bf16.msra.mxu0 %v1508
    %1522 = vmatprep.subr.bf16.mxu0 0
    %1523 = vmatpush1.bf16.msra.mxu0 %v1507
    %1524 = vmatprep.subr.bf16.mxu0 0
    %1525 = vmatpush1.bf16.msra.mxu0 %v1506
    %1526 = vmatprep.subr.bf16.mxu0 0
    %1527 = vmatpush1.bf16.msra.mxu0 %v1505
    %1528 = vmatprep.subr.bf16.mxu0 0
    %1529 = vmatpush1.bf16.msra.mxu0 %v1504
    %1530 = vmatprep.subr.bf16.mxu0 0
    %1531 = vmatpush1.bf16.msra.mxu0 %v1503
    %1532 = vmatprep.subr.bf16.mxu0 0
    %1533 = vmatpush1.bf16.msra.mxu0 %v1502
    %1534 = vmatprep.subr.bf16.mxu0 0
    %1535 = vmatpush2.bf16.msra.mxu0 0
    %1536 = vmatprep.subr.bf16.mxu0 0
    %1537 = vmatpush2.bf16.msra.mxu0 0
    %1538 = vmatprep.subr.bf16.mxu0 0
    %1539 = vmatpush2.bf16.msra.mxu0 0
    %1540 = vmatprep.subr.bf16.mxu0 0
    %1541 = vmatpush2.bf16.msra.mxu0 0
    %1542 = vmatprep.subr.bf16.mxu0 0
    %1543 = vmatpush2.bf16.msra.mxu0 0
    %1544 = vmatprep.subr.bf16.mxu0 0
    %1545 = vmatpush2.bf16.msra.mxu0 0
    %1546 = vmatprep.subr.bf16.mxu0 0
    %1547 = vmatpush2.bf16.msra.mxu0 0
    %1548 = vmatprep.subr.bf16.mxu0 0
    %1549 = vmatpush2.bf16.msra.mxu0 0
    %1550 = vmatprep.mubr.bf16.mxu0 0
    %1551 = vmatmul.mubr.bf16.gmra.mxu0 %v1447
    %v1552 = vpop.f32.mrf.mxu0
    %v1553 = vadd.f32 %v1469, %v1552
    %v1554 = vpop.f32.mrf.mxu0
    %v1555 = vpop.f32.mrf.mxu0
    %v1556 = vpop.f32.mrf.mxu0
    %1557 = vdwg.mxu0
    %v1558 = vmax.f32 %v1553, 0.0
    %v1559 = vpack.c.bf16 %v1558, %v1558
    %s1560 = scalar_lea.vmem [#allocation2], 896
    %v1561 = vld [vmem:[%s1560] sm:$0xf]
    %v1562 = vld [vmem:[%s1560 + $0x4] sm:$0xf]
    %v1563 = vld [vmem:[%s1560 + $0x8] sm:$0xf]
    %v1564 = vld [vmem:[%s1560 + $0xc] sm:$0xf]
    %v1565 = vld [vmem:[%s1560 + $0x10] sm:$0xf]
    %v1566 = vld [vmem:[%s1560 + $0x14] sm:$0xf]
    %v1567 = vld [vmem:[%s1560 + $0x18] sm:$0xf]
    %v1568 = vld [vmem:[%s1560 + $0x1c] sm:$0xf]
    %v1569 = vld [vmem:[%s1560 + $0x20] sm:$0xf]
    %v1570 = vld [vmem:[%s1560 + $0x24] sm:$0xf]
    %v1571 = vld [vmem:[%s1560 + $0x28] sm:$0xf]
    %v1572 = vld [vmem:[%s1560 + $0x2c] sm:$0xf]
    %v1573 = vld [vmem:[%s1560 + $0x30] sm:$0xf]
    %v1574 = vld [vmem:[%s1560 + $0x34] sm:$0xf]
    %v1575 = vld [vmem:[%s1560 + $0x38] sm:$0xf]
    %v1576 = vld [vmem:[%s1560 + $0x3c] sm:$0xf]
    %v1577 = vld [vmem:[#allocation4 + $0xe] sm:$0x1]
    %v1578 = vlaneseq
    %v1579 = vshrl.u32 %v1578, 7
    %v1580 = vsub.s32 0, %v1579
    %v1581 = vrot.slane %v1577, %v1580
    %v1598 = vunpack.c.l.b16 %v1561
    %v1599 = vunpack.c.l.b16 %v1562
    %v1600 = vunpack.c.l.b16 %v1563
    %v1601 = vunpack.c.l.b16 %v1564
    %v1602 = vunpack.c.l.b16 %v1565
    %v1603 = vunpack.c.l.b16 %v1566
    %v1604 = vunpack.c.l.b16 %v1567
    %v1605 = vunpack.c.l.b16 %v1568
    %v1606 = vunpack.c.l.b16 %v1569
    %v1607 = vunpack.c.l.b16 %v1570
    %v1608 = vunpack.c.l.b16 %v1571
    %v1609 = vunpack.c.l.b16 %v1572
    %v1610 = vunpack.c.l.b16 %v1573
    %v1611 = vunpack.c.l.b16 %v1574
    %v1612 = vunpack.c.l.b16 %v1575
    %v1613 = vunpack.c.l.b16 %v1576
    %v1614 = vpack.c.b16 %v1599, %v1598
    %v1615 = vpack.c.b16 %v1601, %v1600
    %v1616 = vpack.c.b16 %v1603, %v1602
    %v1617 = vpack.c.b16 %v1605, %v1604
    %v1618 = vpack.c.b16 %v1607, %v1606
    %v1619 = vpack.c.b16 %v1609, %v1608
    %v1620 = vpack.c.b16 %v1611, %v1610
    %v1621 = vpack.c.b16 %v1613, %v1612
    %1630 = vmatprep.subr.bf16.mxu0 0
    %1631 = vmatpush1.bf16.msra.mxu0 %v1621
    %1632 = vmatprep.subr.bf16.mxu0 0
    %1633 = vmatpush1.bf16.msra.mxu0 %v1620
    %1634 = vmatprep.subr.bf16.mxu0 0
    %1635 = vmatpush1.bf16.msra.mxu0 %v1619
    %1636 = vmatprep.subr.bf16.mxu0 0
    %1637 = vmatpush1.bf16.msra.mxu0 %v1618
    %1638 = vmatprep.subr.bf16.mxu0 0
    %1639 = vmatpush1.bf16.msra.mxu0 %v1617
    %1640 = vmatprep.subr.bf16.mxu0 0
    %1641 = vmatpush1.bf16.msra.mxu0 %v1616
    %1642 = vmatprep.subr.bf16.mxu0 0
    %1643 = vmatpush1.bf16.msra.mxu0 %v1615
    %1644 = vmatprep.subr.bf16.mxu0 0
    %1645 = vmatpush1.bf16.msra.mxu0 %v1614
    %1646 = vmatprep.subr.bf16.mxu0 0
    %1647 = vmatpush2.bf16.msra.mxu0 0
    %1648 = vmatprep.subr.bf16.mxu0 0
    %1649 = vmatpush2.bf16.msra.mxu0 0
    %1650 = vmatprep.subr.bf16.mxu0 0
    %1651 = vmatpush2.bf16.msra.mxu0 0
    %1652 = vmatprep.subr.bf16.mxu0 0
    %1653 = vmatpush2.bf16.msra.mxu0 0
    %1654 = vmatprep.subr.bf16.mxu0 0
    %1655 = vmatpush2.bf16.msra.mxu0 0
    %1656 = vmatprep.subr.bf16.mxu0 0
    %1657 = vmatpush2.bf16.msra.mxu0 0
    %1658 = vmatprep.subr.bf16.mxu0 0
    %1659 = vmatpush2.bf16.msra.mxu0 0
    %1660 = vmatprep.subr.bf16.mxu0 0
    %1661 = vmatpush2.bf16.msra.mxu0 0
    %1662 = vmatprep.mubr.bf16.mxu0 0
    %1663 = vmatmul.mubr.bf16.gmra.mxu0 %v1559
    %v1664 = vpop.f32.mrf.mxu0
    %v1665 = vadd.f32 %v1581, %v1664
    %v1666 = vpop.f32.mrf.mxu0
    %v1667 = vpop.f32.mrf.mxu0
    %v1668 = vpop.f32.mrf.mxu0
    %1669 = vdwg.mxu0
    %v1670 = vmax.f32 %v1665, 0.0
    %v1671 = vpack.c.bf16 %v1670, %v1670
    %s1672 = scalar_lea.vmem [#allocation2], 960
    %v1673 = vld [vmem:[%s1672] sm:$0xf]
    %v1674 = vld [vmem:[%s1672 + $0x4] sm:$0xf]
    %v1675 = vld [vmem:[%s1672 + $0x8] sm:$0xf]
    %v1676 = vld [vmem:[%s1672 + $0xc] sm:$0xf]
    %v1677 = vld [vmem:[%s1672 + $0x10] sm:$0xf]
    %v1678 = vld [vmem:[%s1672 + $0x14] sm:$0xf]
    %v1679 = vld [vmem:[%s1672 + $0x18] sm:$0xf]
    %v1680 = vld [vmem:[%s1672 + $0x1c] sm:$0xf]
    %v1681 = vld [vmem:[%s1672 + $0x20] sm:$0xf]
    %v1682 = vld [vmem:[%s1672 + $0x24] sm:$0xf]
    %v1683 = vld [vmem:[%s1672 + $0x28] sm:$0xf]
    %v1684 = vld [vmem:[%s1672 + $0x2c] sm:$0xf]
    %v1685 = vld [vmem:[%s1672 + $0x30] sm:$0xf]
    %v1686 = vld [vmem:[%s1672 + $0x34] sm:$0xf]
    %v1687 = vld [vmem:[%s1672 + $0x38] sm:$0xf]
    %v1688 = vld [vmem:[%s1672 + $0x3c] sm:$0xf]
    %v1689 = vld [vmem:[#allocation4 + $0xf] sm:$0x1]
    %v1690 = vlaneseq
    %v1691 = vshrl.u32 %v1690, 7
    %v1692 = vsub.s32 0, %v1691
    %v1693 = vrot.slane %v1689, %v1692
    %v1710 = vunpack.c.l.b16 %v1673
    %v1711 = vunpack.c.l.b16 %v1674
    %v1712 = vunpack.c.l.b16 %v1675
    %v1713 = vunpack.c.l.b16 %v1676
    %v1714 = vunpack.c.l.b16 %v1677
    %v1715 = vunpack.c.l.b16 %v1678
    %v1716 = vunpack.c.l.b16 %v1679
    %v1717 = vunpack.c.l.b16 %v1680
    %v1718 = vunpack.c.l.b16 %v1681
    %v1719 = vunpack.c.l.b16 %v1682
    %v1720 = vunpack.c.l.b16 %v1683
    %v1721 = vunpack.c.l.b16 %v1684
    %v1722 = vunpack.c.l.b16 %v1685
    %v1723 = vunpack.c.l.b16 %v1686
    %v1724 = vunpack.c.l.b16 %v1687
    %v1725 = vunpack.c.l.b16 %v1688
    %v1726 = vpack.c.b16 %v1711, %v1710
    %v1727 = vpack.c.b16 %v1713, %v1712
    %v1728 = vpack.c.b16 %v1715, %v1714
    %v1729 = vpack.c.b16 %v1717, %v1716
    %v1730 = vpack.c.b16 %v1719, %v1718
    %v1731 = vpack.c.b16 %v1721, %v1720
    %v1732 = vpack.c.b16 %v1723, %v1722
    %v1733 = vpack.c.b16 %v1725, %v1724
    %1742 = vmatprep.subr.bf16.mxu0 0
    %1743 = vmatpush1.bf16.msra.mxu0 %v1733
    %1744 = vmatprep.subr.bf16.mxu0 0
    %1745 = vmatpush1.bf16.msra.mxu0 %v1732
    %1746 = vmatprep.subr.bf16.mxu0 0
    %1747 = vmatpush1.bf16.msra.mxu0 %v1731
    %1748 = vmatprep.subr.bf16.mxu0 0
    %1749 = vmatpush1.bf16.msra.mxu0 %v1730
    %1750 = vmatprep.subr.bf16.mxu0 0
    %1751 = vmatpush1.bf16.msra.mxu0 %v1729
    %1752 = vmatprep.subr.bf16.mxu0 0
    %1753 = vmatpush1.bf16.msra.mxu0 %v1728
    %1754 = vmatprep.subr.bf16.mxu0 0
    %1755 = vmatpush1.bf16.msra.mxu0 %v1727
    %1756 = vmatprep.subr.bf16.mxu0 0
    %1757 = vmatpush1.bf16.msra.mxu0 %v1726
    %1758 = vmatprep.subr.bf16.mxu0 0
    %1759 = vmatpush2.bf16.msra.mxu0 0
    %1760 = vmatprep.subr.bf16.mxu0 0
    %1761 = vmatpush2.bf16.msra.mxu0 0
    %1762 = vmatprep.subr.bf16.mxu0 0
    %1763 = vmatpush2.bf16.msra.mxu0 0
    %1764 = vmatprep.subr.bf16.mxu0 0
    %1765 = vmatpush2.bf16.msra.mxu0 0
    %1766 = vmatprep.subr.bf16.mxu0 0
    %1767 = vmatpush2.bf16.msra.mxu0 0
    %1768 = vmatprep.subr.bf16.mxu0 0
    %1769 = vmatpush2.bf16.msra.mxu0 0
    %1770 = vmatprep.subr.bf16.mxu0 0
    %1771 = vmatpush2.bf16.msra.mxu0 0
    %1772 = vmatprep.subr.bf16.mxu0 0
    %1773 = vmatpush2.bf16.msra.mxu0 0
    %1774 = vmatprep.mubr.bf16.mxu0 0
    %1775 = vmatmul.mubr.bf16.gmra.mxu0 %v1671
    %v1776 = vpop.f32.mrf.mxu0
    %v1777 = vadd.f32 %v1693, %v1776
    %v1778 = vpop.f32.mrf.mxu0
    %v1779 = vpop.f32.mrf.mxu0
    %v1780 = vpop.f32.mrf.mxu0
    %1781 = vdwg.mxu0
    %v1782 = vmax.f32 %v1777, 0.0
    %v1783 = vpack.c.bf16 %v1782, %v1782
    %s1784 = scalar_lea.vmem [#allocation2], 1024
    %v1785 = vld [vmem:[%s1784] sm:$0xf]
    %v1786 = vld [vmem:[%s1784 + $0x4] sm:$0xf]
    %v1787 = vld [vmem:[%s1784 + $0x8] sm:$0xf]
    %v1788 = vld [vmem:[%s1784 + $0xc] sm:$0xf]
    %v1789 = vld [vmem:[%s1784 + $0x10] sm:$0xf]
    %v1790 = vld [vmem:[%s1784 + $0x14] sm:$0xf]
    %v1791 = vld [vmem:[%s1784 + $0x18] sm:$0xf]
    %v1792 = vld [vmem:[%s1784 + $0x1c] sm:$0xf]
    %v1793 = vld [vmem:[%s1784 + $0x20] sm:$0xf]
    %v1794 = vld [vmem:[%s1784 + $0x24] sm:$0xf]
    %v1795 = vld [vmem:[%s1784 + $0x28] sm:$0xf]
    %v1796 = vld [vmem:[%s1784 + $0x2c] sm:$0xf]
    %v1797 = vld [vmem:[%s1784 + $0x30] sm:$0xf]
    %v1798 = vld [vmem:[%s1784 + $0x34] sm:$0xf]
    %v1799 = vld [vmem:[%s1784 + $0x38] sm:$0xf]
    %v1800 = vld [vmem:[%s1784 + $0x3c] sm:$0xf]
    %v1801 = vld [vmem:[#allocation4 + $0x10] sm:$0x1]
    %v1802 = vlaneseq
    %v1803 = vshrl.u32 %v1802, 7
    %v1804 = vsub.s32 0, %v1803
    %v1805 = vrot.slane %v1801, %v1804
    %v1822 = vunpack.c.l.b16 %v1785
    %v1823 = vunpack.c.l.b16 %v1786
    %v1824 = vunpack.c.l.b16 %v1787
    %v1825 = vunpack.c.l.b16 %v1788
    %v1826 = vunpack.c.l.b16 %v1789
    %v1827 = vunpack.c.l.b16 %v1790
    %v1828 = vunpack.c.l.b16 %v1791
    %v1829 = vunpack.c.l.b16 %v1792
    %v1830 = vunpack.c.l.b16 %v1793
    %v1831 = vunpack.c.l.b16 %v1794
    %v1832 = vunpack.c.l.b16 %v1795
    %v1833 = vunpack.c.l.b16 %v1796
    %v1834 = vunpack.c.l.b16 %v1797
    %v1835 = vunpack.c.l.b16 %v1798
    %v1836 = vunpack.c.l.b16 %v1799
    %v1837 = vunpack.c.l.b16 %v1800
    %v1838 = vpack.c.b16 %v1823, %v1822
    %v1839 = vpack.c.b16 %v1825, %v1824
    %v1840 = vpack.c.b16 %v1827, %v1826
    %v1841 = vpack.c.b16 %v1829, %v1828
    %v1842 = vpack.c.b16 %v1831, %v1830
    %v1843 = vpack.c.b16 %v1833, %v1832
    %v1844 = vpack.c.b16 %v1835, %v1834
    %v1845 = vpack.c.b16 %v1837, %v1836
    %1854 = vmatprep.subr.bf16.mxu0 0
    %1855 = vmatpush1.bf16.msra.mxu0 %v1845
    %1856 = vmatprep.subr.bf16.mxu0 0
    %1857 = vmatpush1.bf16.msra.mxu0 %v1844
    %1858 = vmatprep.subr.bf16.mxu0 0
    %1859 = vmatpush1.bf16.msra.mxu0 %v1843
    %1860 = vmatprep.subr.bf16.mxu0 0
    %1861 = vmatpush1.bf16.msra.mxu0 %v1842
    %1862 = vmatprep.subr.bf16.mxu0 0
    %1863 = vmatpush1.bf16.msra.mxu0 %v1841
    %1864 = vmatprep.subr.bf16.mxu0 0
    %1865 = vmatpush1.bf16.msra.mxu0 %v1840
    %1866 = vmatprep.subr.bf16.mxu0 0
    %1867 = vmatpush1.bf16.msra.mxu0 %v1839
    %1868 = vmatprep.subr.bf16.mxu0 0
    %1869 = vmatpush1.bf16.msra.mxu0 %v1838
    %1870 = vmatprep.subr.bf16.mxu0 0
    %1871 = vmatpush2.bf16.msra.mxu0 0
    %1872 = vmatprep.subr.bf16.mxu0 0
    %1873 = vmatpush2.bf16.msra.mxu0 0
    %1874 = vmatprep.subr.bf16.mxu0 0
    %1875 = vmatpush2.bf16.msra.mxu0 0
    %1876 = vmatprep.subr.bf16.mxu0 0
    %1877 = vmatpush2.bf16.msra.mxu0 0
    %1878 = vmatprep.subr.bf16.mxu0 0
    %1879 = vmatpush2.bf16.msra.mxu0 0
    %1880 = vmatprep.subr.bf16.mxu0 0
    %1881 = vmatpush2.bf16.msra.mxu0 0
    %1882 = vmatprep.subr.bf16.mxu0 0
    %1883 = vmatpush2.bf16.msra.mxu0 0
    %1884 = vmatprep.subr.bf16.mxu0 0
    %1885 = vmatpush2.bf16.msra.mxu0 0
    %1886 = vmatprep.mubr.bf16.mxu0 0
    %1887 = vmatmul.mubr.bf16.gmra.mxu0 %v1783
    %v1888 = vpop.f32.mrf.mxu0
    %v1889 = vadd.f32 %v1805, %v1888
    %v1890 = vpop.f32.mrf.mxu0
    %v1891 = vpop.f32.mrf.mxu0
    %v1892 = vpop.f32.mrf.mxu0
    %1893 = vdwg.mxu0
    %v1894 = vmax.f32 %v1889, 0.0
    %v1895 = vpack.c.bf16 %v1894, %v1894
    %s1896 = scalar_lea.vmem [#allocation2], 1088
    %v1897 = vld [vmem:[%s1896] sm:$0xf]
    %v1898 = vld [vmem:[%s1896 + $0x4] sm:$0xf]
    %v1899 = vld [vmem:[%s1896 + $0x8] sm:$0xf]
    %v1900 = vld [vmem:[%s1896 + $0xc] sm:$0xf]
    %v1901 = vld [vmem:[%s1896 + $0x10] sm:$0xf]
    %v1902 = vld [vmem:[%s1896 + $0x14] sm:$0xf]
    %v1903 = vld [vmem:[%s1896 + $0x18] sm:$0xf]
    %v1904 = vld [vmem:[%s1896 + $0x1c] sm:$0xf]
    %v1905 = vld [vmem:[%s1896 + $0x20] sm:$0xf]
    %v1906 = vld [vmem:[%s1896 + $0x24] sm:$0xf]
    %v1907 = vld [vmem:[%s1896 + $0x28] sm:$0xf]
    %v1908 = vld [vmem:[%s1896 + $0x2c] sm:$0xf]
    %v1909 = vld [vmem:[%s1896 + $0x30] sm:$0xf]
    %v1910 = vld [vmem:[%s1896 + $0x34] sm:$0xf]
    %v1911 = vld [vmem:[%s1896 + $0x38] sm:$0xf]
    %v1912 = vld [vmem:[%s1896 + $0x3c] sm:$0xf]
    %v1913 = vld [vmem:[#allocation4 + $0x11] sm:$0x1]
    %v1914 = vlaneseq
    %v1915 = vshrl.u32 %v1914, 7
    %v1916 = vsub.s32 0, %v1915
    %v1917 = vrot.slane %v1913, %v1916
    %v1934 = vunpack.c.l.b16 %v1897
    %v1935 = vunpack.c.l.b16 %v1898
    %v1936 = vunpack.c.l.b16 %v1899
    %v1937 = vunpack.c.l.b16 %v1900
    %v1938 = vunpack.c.l.b16 %v1901
    %v1939 = vunpack.c.l.b16 %v1902
    %v1940 = vunpack.c.l.b16 %v1903
    %v1941 = vunpack.c.l.b16 %v1904
    %v1942 = vunpack.c.l.b16 %v1905
    %v1943 = vunpack.c.l.b16 %v1906
    %v1944 = vunpack.c.l.b16 %v1907
    %v1945 = vunpack.c.l.b16 %v1908
    %v1946 = vunpack.c.l.b16 %v1909
    %v1947 = vunpack.c.l.b16 %v1910
    %v1948 = vunpack.c.l.b16 %v1911
    %v1949 = vunpack.c.l.b16 %v1912
    %v1950 = vpack.c.b16 %v1935, %v1934
    %v1951 = vpack.c.b16 %v1937, %v1936
    %v1952 = vpack.c.b16 %v1939, %v1938
    %v1953 = vpack.c.b16 %v1941, %v1940
    %v1954 = vpack.c.b16 %v1943, %v1942
    %v1955 = vpack.c.b16 %v1945, %v1944
    %v1956 = vpack.c.b16 %v1947, %v1946
    %v1957 = vpack.c.b16 %v1949, %v1948
    %1966 = vmatprep.subr.bf16.mxu0 0
    %1967 = vmatpush1.bf16.msra.mxu0 %v1957
    %1968 = vmatprep.subr.bf16.mxu0 0
    %1969 = vmatpush1.bf16.msra.mxu0 %v1956
    %1970 = vmatprep.subr.bf16.mxu0 0
    %1971 = vmatpush1.bf16.msra.mxu0 %v1955
    %1972 = vmatprep.subr.bf16.mxu0 0
    %1973 = vmatpush1.bf16.msra.mxu0 %v1954
    %1974 = vmatprep.subr.bf16.mxu0 0
    %1975 = vmatpush1.bf16.msra.mxu0 %v1953
    %1976 = vmatprep.subr.bf16.mxu0 0
    %1977 = vmatpush1.bf16.msra.mxu0 %v1952
    %1978 = vmatprep.subr.bf16.mxu0 0
    %1979 = vmatpush1.bf16.msra.mxu0 %v1951
    %1980 = vmatprep.subr.bf16.mxu0 0
    %1981 = vmatpush1.bf16.msra.mxu0 %v1950
    %1982 = vmatprep.subr.bf16.mxu0 0
    %1983 = vmatpush2.bf16.msra.mxu0 0
    %1984 = vmatprep.subr.bf16.mxu0 0
    %1985 = vmatpush2.bf16.msra.mxu0 0
    %1986 = vmatprep.subr.bf16.mxu0 0
    %1987 = vmatpush2.bf16.msra.mxu0 0
    %1988 = vmatprep.subr.bf16.mxu0 0
    %1989 = vmatpush2.bf16.msra.mxu0 0
    %1990 = vmatprep.subr.bf16.mxu0 0
    %1991 = vmatpush2.bf16.msra.mxu0 0
    %1992 = vmatprep.subr.bf16.mxu0 0
    %1993 = vmatpush2.bf16.msra.mxu0 0
    %1994 = vmatprep.subr.bf16.mxu0 0
    %1995 = vmatpush2.bf16.msra.mxu0 0
    %1996 = vmatprep.subr.bf16.mxu0 0
    %1997 = vmatpush2.bf16.msra.mxu0 0
    %1998 = vmatprep.mubr.bf16.mxu0 0
    %1999 = vmatmul.mubr.bf16.gmra.mxu0 %v1895
    %v2000 = vpop.f32.mrf.mxu0
    %v2001 = vadd.f32 %v1917, %v2000
    %v2002 = vpop.f32.mrf.mxu0
    %v2003 = vpop.f32.mrf.mxu0
    %v2004 = vpop.f32.mrf.mxu0
    %2005 = vdwg.mxu0
    %v2006 = vmax.f32 %v2001, 0.0
    %vm2007 = vcmask 80896
    %2008 = vst.msk [vmem:[%s3] sm:$0xff] %vm2007, %v2006
    // Predicated region
    $region22: #{autoencoder_forward.1} parent=1 // pred_check
      _
    $region23: #{autoencoder_forward.1} parent=1 // pred_check_branch
      %2010 = sbr.rel (0) target = $region25
    $region24: #{autoencoder_forward.1} parent=1 // pred_region
      _
    $region25: #{autoencoder_forward.1} parent=1 // pred_fallthru
      _
    // Predicated region
    $region26: #{autoencoder_forward.1} parent=1 // pred_check
      _
    $region27: #{autoencoder_forward.1} parent=1 // pred_check_branch
      %2012 = sbr.rel (0) target = $region29
    $region28: #{autoencoder_forward.1} parent=1 // pred_region
      _
    $region29: #{autoencoder_forward.1} parent=1 // pred_fallthru
      _
    %2013 = vsyncpa [#allocation3], 1
    %2014 = vsyncpa [#allocation5], 1

</llo_original>
